<compile_context>
chip_gen: v7x
topology: tpu7x:2x2x1
jax: 0.10.0
libtpu: 0.0.40
codegen_flags: <defaults>
</compile_context>

<pallas_src>
import jax
import jax.numpy as jnp
from jax import lax
from jax.experimental import pallas as pl
from jax.experimental.pallas import tpu as pltpu

D_STATE = 8     # SSM state size
DT_RANK = 4     # rank of the delta projection
K_CONV = 4      # causal depthwise conv width
OUT_LANE = 128  # lane-dense padded output width


def _silu(v):
    # sigmoid denom via approx reciprocal -> EUP slot instead of VPU divide.
    return v * pl.reciprocal(1.0 + jnp.exp(-v), approx=True)


def _softplus(v):
    return jnp.maximum(v, 0.0) + jnp.log(1.0 + jnp.exp(-jnp.abs(v)))


def _mm(a, b):
    # bf16 MXU inputs, f32 accumulation.
    return jnp.dot(a.astype(jnp.bfloat16), b.astype(jnp.bfloat16),
                   preferred_element_type=jnp.float32)


def mamba_encoder_kernel(
    x_ref,       # (L, in_dim)                one batch element per grid step
    w_in_ref,    # (in_dim, 2*d_inner)        fused x|z input projection
    w_conv_ref,  # (K, d_inner)
    b_conv_ref,  # (1, d_inner)
    w_big_ref,   # (d_inner, 2*sd + d_inner)  fused [B_exp | C_exp | dt] projection
    b_dt_ref,    # (1, d_inner)
    tile_ref,    # (d_inner, sd)  (d'==d_col) lane-tiling matrix
    a_row_ref,   # (1, sd)        A[:, s_col] = -(s_col + 1) (S4D-real)
    r_ref,       # (sd, d_inner)  state-axis reduction matrix
    d_skip_ref,  # (1, d_inner)
    w_out_ref,   # (d_inner, out_pad)  zero-padded to 128 lanes
    o_ref,       # (L, out_pad)   bfloat16
):
    L = x_ref.shape[0]
    d_inner = w_conv_ref.shape[1]
    sd = tile_ref.shape[1]
    K = w_conv_ref.shape[0]

    x = x_ref[...]                                     # [L, in_dim] f32

    # ---- fused input projection: x -> (xz | z) in one matmul ----
    xz_z = _mm(x, w_in_ref[...])                       # [L, 2*d_inner]
    xz = xz_z[:, :d_inner]
    z = xz_z[:, d_inner:]

    # ---- causal depthwise conv1d via sublane rolls + positional mask ----
    row = lax.broadcasted_iota(jnp.int32, (L, d_inner), 0)
    acc = xz * w_conv_ref[K - 1:K, :]                  # shift-0 tap
    for s in range(1, K):
        shifted = jnp.where(row < s, 0.0, pltpu.roll(xz, s, axis=0))   # xz[t-s]
        acc = acc + shifted * w_conv_ref[K - 1 - s:K - s, :]
    xc = _silu(acc + b_conv_ref[...])                  # [L, d_inner]

    # ---- fused data-dependent projections: one [L, d_inner] @ [d_inner, 544] ----
    # Flattened lane-dense (state, channel) layout: col = s * d_inner + d.
    big = _mm(xc, w_big_ref[...])
    b_exp = big[:, :sd]                                # expanded B    [L, sd]
    c_exp = big[:, sd:2 * sd]                          # expanded C    [L, sd]
    dt = _softplus(big[:, 2 * sd:] + b_dt_ref[...])    # [L, d_inner]

    # ---- lane tiling of dt and dt*u in one stacked matmul ----
    tiled = _mm(jnp.concatenate([dt, dt * xc], axis=0), tile_ref[...])   # [2L, sd]
    dA = jnp.exp(tiled[:L, :] * a_row_ref[...])        # exp(dt * A)   [L, sd]
    dBu = tiled[L:, :] * b_exp                         # dt * B * u    [L, sd]

    # ---- full-width Hillis-Steele scan: h_t = dA_t * h_{t-1} + dBu_t ----
    riota = lax.broadcasted_iota(jnp.int32, (L, sd), 0)
    A, U = dA, dBu
    off = 1
    while off < L:                                     # log2(L) parallel steps
        m = riota >= off
        a_prev = jnp.where(m, pltpu.roll(A, off, axis=0), 1.0)
        u_prev = jnp.where(m, pltpu.roll(U, off, axis=0), 0.0)
        U = A * u_prev + U
        A = A * a_prev
        off *= 2
    h = U                                              # h_{-1} = 0 -> h_t = U_t

    # ---- y = sum_s C*h + D*u, gate with SiLU(z), out projection ----
    y = _mm(c_exp * h, r_ref[...]) + xc * d_skip_ref[...]
    y = y * _silu(z)
    o_ref[...] = _mm(y, w_out_ref[...]).astype(o_ref.dtype)   # [L, out_pad] bf16


def init_params(key, in_dim, out_dim, d_inner,
                d_state=D_STATE, dt_rank=DT_RANK, kconv=K_CONV):
    ks = jax.random.split(key, 8)

    def n(k, shape, scale=0.1):
        return jax.random.normal(k, shape, jnp.float32) * scale

    return dict(
        w_in_x=n(ks[0], (in_dim, d_inner)),
        w_in_z=n(ks[1], (in_dim, d_inner)),
        w_conv=n(ks[2], (kconv, d_inner)),
        b_conv=jnp.zeros((1, d_inner), jnp.float32),
        w_dtin=n(ks[3], (d_inner, dt_rank)),
        w_b=n(ks[4], (d_inner, d_state)),
        w_c=n(ks[5], (d_inner, d_state)),
        w_dt=n(ks[6], (dt_rank, d_inner)),
        b_dt=jnp.full((1, d_inner), 0.5, jnp.float32),
        d_skip=jnp.ones((1, d_inner), jnp.float32),
        w_out=n(ks[7], (d_inner, out_dim)),
    )


@jax.jit
def self_select_process(x, params):
    """x: [B, C, H, W] (NCHW)  ->  [B, H*W, out_dim]."""
    B, C, H, W = x.shape
    L = H * W
    # NCHW -> token rows [B*L, C] (channels on the lane axis).
    x_seq = jnp.transpose(x.reshape(B, C, L), (0, 2, 1)).reshape(B * L, C)
    x_seq = x_seq.astype(jnp.float32)

    d_inner = params["w_in_x"].shape[1]
    d_state = params["w_b"].shape[1]
    out_dim = params["w_out"].shape[1]
    kconv = params["w_conv"].shape[0]
    sd = d_state * d_inner
    out_pad = ((out_dim + OUT_LANE - 1) // OUT_LANE) * OUT_LANE

    # ---- shared-operand weight fusion (once per call, outside the kernel) ----
    w_in = jnp.concatenate([params["w_in_x"], params["w_in_z"]], axis=1)
    w_be = jnp.repeat(params["w_b"], d_inner, axis=1)        # col = s*d_inner+d -> w_b[:, s]
    w_ce = jnp.repeat(params["w_c"], d_inner, axis=1)
    w_dt_full = params["w_dtin"] @ params["w_dt"]            # [d_inner, d_inner]
    w_big = jnp.concatenate([w_be, w_ce, w_dt_full], axis=1)  # [d_inner, 2*sd + d_inner]
    w_out_p = jnp.pad(params["w_out"], ((0, 0), (0, out_pad - out_dim)))

    # Structural constants for the flattened (state, channel) lane layout.
    cols = jnp.arange(sd)
    d_col = cols % d_inner
    s_col = cols // d_inner
    tile_mat = (jnp.arange(d_inner)[:, None] == d_col[None, :]).astype(jnp.float32)
    a_row = -(s_col.astype(jnp.float32) + 1.0)[None, :]       # S4D-real A init
    r_mat = (d_col[:, None] == jnp.arange(d_inner)[None, :]).astype(jnp.float32)

    def full(shape):
        return pl.BlockSpec(shape, lambda b: tuple(0 for _ in shape))

    grid_spec = pltpu.PrefetchScalarGridSpec(
        num_scalar_prefetch=0,
        grid=(B,),                                            # one batch element / step
        in_specs=[
            pl.BlockSpec((L, C), lambda b: (b, 0)),
            full((C, 2 * d_inner)),
            full((kconv, d_inner)),
            full((1, d_inner)),
            full((d_inner, 2 * sd + d_inner)),
            full((1, d_inner)),
            full((d_inner, sd)),
            full((1, sd)),
            full((sd, d_inner)),
            full((1, d_inner)),
            full((d_inner, out_pad)),
        ],
        out_specs=pl.BlockSpec((L, out_pad), lambda b: (b, 0)),
    )

    fn = pl.pallas_call(
        mamba_encoder_kernel,
        out_shape=jax.ShapeDtypeStruct((B * L, out_pad), jnp.bfloat16),
        grid_spec=grid_spec,
        compiler_params=pltpu.CompilerParams(
            dimension_semantics=("parallel",),                # v7x: 2nd TC takes batch 1
        ),
    )
    out = fn(x_seq, w_in, params["w_conv"], params["b_conv"],
             w_big, params["b_dt"], tile_mat, a_row, r_mat,
             params["d_skip"], w_out_p)
    return out[:, :out_dim].astype(jnp.float32).reshape(B, L, out_dim)


if __name__ == "__main__":
    # SelfSelectProcess(feat_size=8, in_dim=4, out_dim=16, inner_dim=32)
    B, C, H, W = 2, 4, 8, 8
    in_dim, out_dim, inner_dim = C, 16, 32

    key = jax.random.PRNGKey(0)
    kx, kp = jax.random.split(key)
    x = jax.random.normal(kx, (B, C, H, W), jnp.float32)
    params = init_params(kp, in_dim, out_dim, inner_dim)

    out = self_select_process(x, params)
    out = jax.block_until_ready(out)

    assert out.shape == (B, H * W, out_dim), out.shape
    assert bool(jnp.all(jnp.isfinite(out)))
    print("KERNEL_OK")
</pallas_src>

<mosaic_0001>
module attributes {stable_mosaic.version = 11 : i64} {
  func.func @mamba_encoder_kernel(%arg0: i32, %arg1: memref<64x4xf32, #tpu.memory_space<vmem>>, %arg2: memref<4x64xf32, #tpu.memory_space<vmem>>, %arg3: memref<4x32xf32, #tpu.memory_space<vmem>>, %arg4: memref<1x32xf32, #tpu.memory_space<vmem>>, %arg5: memref<32x544xf32, #tpu.memory_space<vmem>>, %arg6: memref<1x32xf32, #tpu.memory_space<vmem>>, %arg7: memref<32x256xf32, #tpu.memory_space<vmem>>, %arg8: memref<1x256xf32, #tpu.memory_space<vmem>>, %arg9: memref<256x32xf32, #tpu.memory_space<vmem>>, %arg10: memref<1x32xf32, #tpu.memory_space<vmem>>, %arg11: memref<32x128xf32, #tpu.memory_space<vmem>>, %arg12: memref<64x128xbf16, #tpu.memory_space<vmem>>) attributes {dimension_semantics = [#tpu.dimension_semantics<parallel>], iteration_bounds = array<i64: 2>, scalar_prefetch = 0 : i64, scratch_operands = 0 : i64, tpu.core_type = #tpu.core_type<tc>, window_params = [{transform_indices = @transform_0, window_bounds = array<i64: 64, 4>}, {pipeline_mode = #tpu.pipeline_mode<synchronous>, transform_indices = @transform_1, window_bounds = array<i64: 4, 64>}, {pipeline_mode = #tpu.pipeline_mode<synchronous>, transform_indices = @transform_2, window_bounds = array<i64: 4, 32>}, {pipeline_mode = #tpu.pipeline_mode<synchronous>, transform_indices = @transform_3, window_bounds = array<i64: 1, 32>}, {pipeline_mode = #tpu.pipeline_mode<synchronous>, transform_indices = @transform_4, window_bounds = array<i64: 32, 544>}, {pipeline_mode = #tpu.pipeline_mode<synchronous>, transform_indices = @transform_5, window_bounds = array<i64: 1, 32>}, {pipeline_mode = #tpu.pipeline_mode<synchronous>, transform_indices = @transform_6, window_bounds = array<i64: 32, 256>}, {pipeline_mode = #tpu.pipeline_mode<synchronous>, transform_indices = @transform_7, window_bounds = array<i64: 1, 256>}, {pipeline_mode = #tpu.pipeline_mode<synchronous>, transform_indices = @transform_8, window_bounds = array<i64: 256, 32>}, {pipeline_mode = #tpu.pipeline_mode<synchronous>, transform_indices = @transform_9, window_bounds = array<i64: 1, 32>}, {pipeline_mode = #tpu.pipeline_mode<synchronous>, transform_indices = @transform_10, window_bounds = array<i64: 32, 128>}, {transform_indices = @transform_11, window_bounds = array<i64: 64, 128>}]} {
    %c0 = arith.constant 0 : index
    %c0_0 = arith.constant 0 : index
    %0 = vector.load %arg1[%c0, %c0_0] : memref<64x4xf32, #tpu.memory_space<vmem>>, vector<64x4xf32>
    %c0_1 = arith.constant 0 : index
    %c0_2 = arith.constant 0 : index
    %1 = vector.load %arg2[%c0_1, %c0_2] : memref<4x64xf32, #tpu.memory_space<vmem>>, vector<4x64xf32>
    %2 = arith.truncf %0 : vector<64x4xf32> to vector<64x4xbf16>
    %3 = arith.truncf %1 : vector<4x64xf32> to vector<4x64xbf16>
    %cst = arith.constant dense<0.000000e+00> : vector<64x64xf32>
    %4 = tpu.matmul %2, %3, %cst {dimension_numbers = #tpu.dot_dimension_numbers<[1], [0], [0], [1], [0, 0, 1, 1], [], []>} : vector<64x4xbf16>, vector<4x64xbf16>, vector<64x64xf32> -> vector<64x64xf32>
    %5 = vector.extract_strided_slice %4 {offsets = [0, 0], sizes = [64, 32], strides = [1, 1]} : vector<64x64xf32> to vector<64x32xf32>
    %6 = vector.extract_strided_slice %4 {offsets = [0, 32], sizes = [64, 32], strides = [1, 1]} : vector<64x64xf32> to vector<64x32xf32>
    %7 = tpu.iota {dimensions = array<i32: 0>} : vector<64x32xi32>
    %c3 = arith.constant 3 : index
    %c0_3 = arith.constant 0 : index
    %8 = vector.load %arg3[%c3, %c0_3] : memref<4x32xf32, #tpu.memory_space<vmem>>, vector<1x32xf32>
    %9 = vector.broadcast %8 : vector<1x32xf32> to vector<64x32xf32>
    %10 = arith.mulf %5, %9 : vector<64x32xf32>
    %c1_i32 = arith.constant 1 : i32
    %11 = vector.broadcast %c1_i32 : i32 to vector<64x32xi32>
    %12 = arith.cmpi slt, %7, %11 : vector<64x32xi32>
    %c1_i32_4 = arith.constant 1 : i32
    %13 = tpu.dynamic_rotate %5 by %c1_i32_4 dim 0 : vector<64x32xf32>, i32 -> vector<64x32xf32>
    %cst_5 = arith.constant 0.000000e+00 : f32
    %14 = vector.broadcast %cst_5 : f32 to vector<64x32xf32>
    %15 = arith.select %12, %14, %13 : vector<64x32xi1>, vector<64x32xf32>
    %c2 = arith.constant 2 : index
    %c0_6 = arith.constant 0 : index
    %16 = vector.load %arg3[%c2, %c0_6] : memref<4x32xf32, #tpu.memory_space<vmem>>, vector<1x32xf32>
    %17 = vector.broadcast %16 : vector<1x32xf32> to vector<64x32xf32>
    %18 = arith.mulf %15, %17 : vector<64x32xf32>
    %19 = arith.addf %10, %18 : vector<64x32xf32>
    %c2_i32 = arith.constant 2 : i32
    %20 = vector.broadcast %c2_i32 : i32 to vector<64x32xi32>
    %21 = arith.cmpi slt, %7, %20 : vector<64x32xi32>
    %c2_i32_7 = arith.constant 2 : i32
    %22 = tpu.dynamic_rotate %5 by %c2_i32_7 dim 0 : vector<64x32xf32>, i32 -> vector<64x32xf32>
    %cst_8 = arith.constant 0.000000e+00 : f32
    %23 = vector.broadcast %cst_8 : f32 to vector<64x32xf32>
    %24 = arith.select %21, %23, %22 : vector<64x32xi1>, vector<64x32xf32>
    %c1 = arith.constant 1 : index
    %c0_9 = arith.constant 0 : index
    %25 = vector.load %arg3[%c1, %c0_9] : memref<4x32xf32, #tpu.memory_space<vmem>>, vector<1x32xf32>
    %26 = vector.broadcast %25 : vector<1x32xf32> to vector<64x32xf32>
    %27 = arith.mulf %24, %26 : vector<64x32xf32>
    %28 = arith.addf %19, %27 : vector<64x32xf32>
    %c3_i32 = arith.constant 3 : i32
    %29 = vector.broadcast %c3_i32 : i32 to vector<64x32xi32>
    %30 = arith.cmpi slt, %7, %29 : vector<64x32xi32>
    %c3_i32_10 = arith.constant 3 : i32
    %31 = tpu.dynamic_rotate %5 by %c3_i32_10 dim 0 : vector<64x32xf32>, i32 -> vector<64x32xf32>
    %cst_11 = arith.constant 0.000000e+00 : f32
    %32 = vector.broadcast %cst_11 : f32 to vector<64x32xf32>
    %33 = arith.select %30, %32, %31 : vector<64x32xi1>, vector<64x32xf32>
    %c0_12 = arith.constant 0 : index
    %c0_13 = arith.constant 0 : index
    %34 = vector.load %arg3[%c0_12, %c0_13] : memref<4x32xf32, #tpu.memory_space<vmem>>, vector<1x32xf32>
    %35 = vector.broadcast %34 : vector<1x32xf32> to vector<64x32xf32>
    %36 = arith.mulf %33, %35 : vector<64x32xf32>
    %37 = arith.addf %28, %36 : vector<64x32xf32>
    %c0_14 = arith.constant 0 : index
    %c0_15 = arith.constant 0 : index
    %38 = vector.load %arg4[%c0_14, %c0_15] : memref<1x32xf32, #tpu.memory_space<vmem>>, vector<1x32xf32>
    %39 = vector.broadcast %38 : vector<1x32xf32> to vector<64x32xf32>
    %40 = arith.addf %37, %39 : vector<64x32xf32>
    %cst_16 = arith.constant 0.000000e+00 : f32
    %41 = vector.broadcast %cst_16 : f32 to vector<64x32xf32>
    %42 = arith.subf %41, %40 : vector<64x32xf32>
    %43 = math.exp %42 : vector<64x32xf32>
    %cst_17 = arith.constant 1.000000e+00 : f32
    %44 = vector.broadcast %cst_17 : f32 to vector<64x32xf32>
    %45 = arith.addf %44, %43 : vector<64x32xf32>
    %46 = tpu.reciprocal %45 {approx = true} : vector<64x32xf32> -> vector<64x32xf32>
    %47 = arith.mulf %40, %46 : vector<64x32xf32>
    %c0_18 = arith.constant 0 : index
    %c0_19 = arith.constant 0 : index
    %48 = vector.load %arg5[%c0_18, %c0_19] : memref<32x544xf32, #tpu.memory_space<vmem>>, vector<32x544xf32>
    %49 = arith.truncf %47 : vector<64x32xf32> to vector<64x32xbf16>
    %50 = arith.truncf %48 : vector<32x544xf32> to vector<32x544xbf16>
    %cst_20 = arith.constant dense<0.000000e+00> : vector<64x544xf32>
    %51 = tpu.matmul %49, %50, %cst_20 {dimension_numbers = #tpu.dot_dimension_numbers<[1], [0], [0], [1], [0, 0, 1, 1], [], []>} : vector<64x32xbf16>, vector<32x544xbf16>, vector<64x544xf32> -> vector<64x544xf32>
    %52 = vector.extract_strided_slice %51 {offsets = [0, 0], sizes = [64, 256], strides = [1, 1]} : vector<64x544xf32> to vector<64x256xf32>
    %53 = vector.extract_strided_slice %51 {offsets = [0, 256], sizes = [64, 256], strides = [1, 1]} : vector<64x544xf32> to vector<64x256xf32>
    %54 = vector.extract_strided_slice %51 {offsets = [0, 512], sizes = [64, 32], strides = [1, 1]} : vector<64x544xf32> to vector<64x32xf32>
    %c0_21 = arith.constant 0 : index
    %c0_22 = arith.constant 0 : index
    %55 = vector.load %arg6[%c0_21, %c0_22] : memref<1x32xf32, #tpu.memory_space<vmem>>, vector<1x32xf32>
    %56 = vector.broadcast %55 : vector<1x32xf32> to vector<64x32xf32>
    %57 = arith.addf %54, %56 : vector<64x32xf32>
    %cst_23 = arith.constant 0.000000e+00 : f32
    %58 = vector.broadcast %cst_23 : f32 to vector<64x32xf32>
    %59 = arith.maximumf %57, %58 : vector<64x32xf32>
    %60 = math.absf %57 : vector<64x32xf32>
    %cst_24 = arith.constant 0.000000e+00 : f32
    %61 = vector.broadcast %cst_24 : f32 to vector<64x32xf32>
    %62 = arith.subf %61, %60 : vector<64x32xf32>
    %63 = math.exp %62 : vector<64x32xf32>
    %cst_25 = arith.constant 1.000000e+00 : f32
    %64 = vector.broadcast %cst_25 : f32 to vector<64x32xf32>
    %65 = arith.addf %64, %63 : vector<64x32xf32>
    %66 = math.log %65 : vector<64x32xf32>
    %67 = arith.addf %59, %66 : vector<64x32xf32>
    %68 = arith.mulf %67, %47 : vector<64x32xf32>
    %69 = tpu.concatenate %67, %68 in 0 : vector<64x32xf32>, vector<64x32xf32> -> vector<128x32xf32>
    %c0_26 = arith.constant 0 : index
    %c0_27 = arith.constant 0 : index
    %70 = vector.load %arg7[%c0_26, %c0_27] : memref<32x256xf32, #tpu.memory_space<vmem>>, vector<32x256xf32>
    %71 = arith.truncf %69 : vector<128x32xf32> to vector<128x32xbf16>
    %72 = arith.truncf %70 : vector<32x256xf32> to vector<32x256xbf16>
    %cst_28 = arith.constant dense<0.000000e+00> : vector<128x256xf32>
    %73 = tpu.matmul %71, %72, %cst_28 {dimension_numbers = #tpu.dot_dimension_numbers<[1], [0], [0], [1], [0, 0, 1, 1], [], []>} : vector<128x32xbf16>, vector<32x256xbf16>, vector<128x256xf32> -> vector<128x256xf32>
    %74 = vector.extract_strided_slice %73 {offsets = [0, 0], sizes = [64, 256], strides = [1, 1]} : vector<128x256xf32> to vector<64x256xf32>
    %c0_29 = arith.constant 0 : index
    %c0_30 = arith.constant 0 : index
    %75 = vector.load %arg8[%c0_29, %c0_30] : memref<1x256xf32, #tpu.memory_space<vmem>>, vector<1x256xf32>
    %76 = vector.broadcast %75 : vector<1x256xf32> to vector<64x256xf32>
    %77 = arith.mulf %74, %76 : vector<64x256xf32>
    %78 = math.exp %77 : vector<64x256xf32>
    %79 = vector.extract_strided_slice %73 {offsets = [64, 0], sizes = [64, 256], strides = [1, 1]} : vector<128x256xf32> to vector<64x256xf32>
    %80 = arith.mulf %79, %52 : vector<64x256xf32>
    %81 = tpu.iota {dimensions = array<i32: 0>} : vector<64x256xi32>
    %c1_i32_31 = arith.constant 1 : i32
    %82 = vector.broadcast %c1_i32_31 : i32 to vector<64x256xi32>
    %83 = arith.cmpi sge, %81, %82 : vector<64x256xi32>
    %c1_i32_32 = arith.constant 1 : i32
    %84 = tpu.dynamic_rotate %78 by %c1_i32_32 dim 0 : vector<64x256xf32>, i32 -> vector<64x256xf32>
    %cst_33 = arith.constant 1.000000e+00 : f32
    %85 = vector.broadcast %cst_33 : f32 to vector<64x256xf32>
    %86 = arith.select %83, %84, %85 : vector<64x256xi1>, vector<64x256xf32>
    %c1_i32_34 = arith.constant 1 : i32
    %87 = tpu.dynamic_rotate %80 by %c1_i32_34 dim 0 : vector<64x256xf32>, i32 -> vector<64x256xf32>
    %cst_35 = arith.constant 0.000000e+00 : f32
    %88 = vector.broadcast %cst_35 : f32 to vector<64x256xf32>
    %89 = arith.select %83, %87, %88 : vector<64x256xi1>, vector<64x256xf32>
    %90 = arith.mulf %78, %89 : vector<64x256xf32>
    %91 = arith.addf %90, %80 : vector<64x256xf32>
    %92 = arith.mulf %78, %86 : vector<64x256xf32>
    %c2_i32_36 = arith.constant 2 : i32
    %93 = vector.broadcast %c2_i32_36 : i32 to vector<64x256xi32>
    %94 = arith.cmpi sge, %81, %93 : vector<64x256xi32>
    %c2_i32_37 = arith.constant 2 : i32
    %95 = tpu.dynamic_rotate %92 by %c2_i32_37 dim 0 : vector<64x256xf32>, i32 -> vector<64x256xf32>
    %cst_38 = arith.constant 1.000000e+00 : f32
    %96 = vector.broadcast %cst_38 : f32 to vector<64x256xf32>
    %97 = arith.select %94, %95, %96 : vector<64x256xi1>, vector<64x256xf32>
    %c2_i32_39 = arith.constant 2 : i32
    %98 = tpu.dynamic_rotate %91 by %c2_i32_39 dim 0 : vector<64x256xf32>, i32 -> vector<64x256xf32>
    %cst_40 = arith.constant 0.000000e+00 : f32
    %99 = vector.broadcast %cst_40 : f32 to vector<64x256xf32>
    %100 = arith.select %94, %98, %99 : vector<64x256xi1>, vector<64x256xf32>
    %101 = arith.mulf %92, %100 : vector<64x256xf32>
    %102 = arith.addf %101, %91 : vector<64x256xf32>
    %103 = arith.mulf %92, %97 : vector<64x256xf32>
    %c4_i32 = arith.constant 4 : i32
    %104 = vector.broadcast %c4_i32 : i32 to vector<64x256xi32>
    %105 = arith.cmpi sge, %81, %104 : vector<64x256xi32>
    %c4_i32_41 = arith.constant 4 : i32
    %106 = tpu.dynamic_rotate %103 by %c4_i32_41 dim 0 : vector<64x256xf32>, i32 -> vector<64x256xf32>
    %cst_42 = arith.constant 1.000000e+00 : f32
    %107 = vector.broadcast %cst_42 : f32 to vector<64x256xf32>
    %108 = arith.select %105, %106, %107 : vector<64x256xi1>, vector<64x256xf32>
    %c4_i32_43 = arith.constant 4 : i32
    %109 = tpu.dynamic_rotate %102 by %c4_i32_43 dim 0 : vector<64x256xf32>, i32 -> vector<64x256xf32>
    %cst_44 = arith.constant 0.000000e+00 : f32
    %110 = vector.broadcast %cst_44 : f32 to vector<64x256xf32>
    %111 = arith.select %105, %109, %110 : vector<64x256xi1>, vector<64x256xf32>
    %112 = arith.mulf %103, %111 : vector<64x256xf32>
    %113 = arith.addf %112, %102 : vector<64x256xf32>
    %114 = arith.mulf %103, %108 : vector<64x256xf32>
    %c8_i32 = arith.constant 8 : i32
    %115 = vector.broadcast %c8_i32 : i32 to vector<64x256xi32>
    %116 = arith.cmpi sge, %81, %115 : vector<64x256xi32>
    %c8_i32_45 = arith.constant 8 : i32
    %117 = tpu.dynamic_rotate %114 by %c8_i32_45 dim 0 : vector<64x256xf32>, i32 -> vector<64x256xf32>
    %cst_46 = arith.constant 1.000000e+00 : f32
    %118 = vector.broadcast %cst_46 : f32 to vector<64x256xf32>
    %119 = arith.select %116, %117, %118 : vector<64x256xi1>, vector<64x256xf32>
    %c8_i32_47 = arith.constant 8 : i32
    %120 = tpu.dynamic_rotate %113 by %c8_i32_47 dim 0 : vector<64x256xf32>, i32 -> vector<64x256xf32>
    %cst_48 = arith.constant 0.000000e+00 : f32
    %121 = vector.broadcast %cst_48 : f32 to vector<64x256xf32>
    %122 = arith.select %116, %120, %121 : vector<64x256xi1>, vector<64x256xf32>
    %123 = arith.mulf %114, %122 : vector<64x256xf32>
    %124 = arith.addf %123, %113 : vector<64x256xf32>
    %125 = arith.mulf %114, %119 : vector<64x256xf32>
    %c16_i32 = arith.constant 16 : i32
    %126 = vector.broadcast %c16_i32 : i32 to vector<64x256xi32>
    %127 = arith.cmpi sge, %81, %126 : vector<64x256xi32>
    %c16_i32_49 = arith.constant 16 : i32
    %128 = tpu.dynamic_rotate %125 by %c16_i32_49 dim 0 : vector<64x256xf32>, i32 -> vector<64x256xf32>
    %cst_50 = arith.constant 1.000000e+00 : f32
    %129 = vector.broadcast %cst_50 : f32 to vector<64x256xf32>
    %130 = arith.select %127, %128, %129 : vector<64x256xi1>, vector<64x256xf32>
    %c16_i32_51 = arith.constant 16 : i32
    %131 = tpu.dynamic_rotate %124 by %c16_i32_51 dim 0 : vector<64x256xf32>, i32 -> vector<64x256xf32>
    %cst_52 = arith.constant 0.000000e+00 : f32
    %132 = vector.broadcast %cst_52 : f32 to vector<64x256xf32>
    %133 = arith.select %127, %131, %132 : vector<64x256xi1>, vector<64x256xf32>
    %134 = arith.mulf %125, %133 : vector<64x256xf32>
    %135 = arith.addf %134, %124 : vector<64x256xf32>
    %136 = arith.mulf %125, %130 : vector<64x256xf32>
    %c32_i32 = arith.constant 32 : i32
    %137 = vector.broadcast %c32_i32 : i32 to vector<64x256xi32>
    %138 = arith.cmpi sge, %81, %137 : vector<64x256xi32>
    %c32_i32_53 = arith.constant 32 : i32
    %139 = tpu.dynamic_rotate %135 by %c32_i32_53 dim 0 : vector<64x256xf32>, i32 -> vector<64x256xf32>
    %cst_54 = arith.constant 0.000000e+00 : f32
    %140 = vector.broadcast %cst_54 : f32 to vector<64x256xf32>
    %141 = arith.select %138, %139, %140 : vector<64x256xi1>, vector<64x256xf32>
    %142 = arith.mulf %136, %141 : vector<64x256xf32>
    %143 = arith.addf %142, %135 : vector<64x256xf32>
    %144 = arith.mulf %53, %143 : vector<64x256xf32>
    %c0_55 = arith.constant 0 : index
    %c0_56 = arith.constant 0 : index
    %145 = vector.load %arg9[%c0_55, %c0_56] : memref<256x32xf32, #tpu.memory_space<vmem>>, vector<256x32xf32>
    %146 = arith.truncf %144 : vector<64x256xf32> to vector<64x256xbf16>
    %147 = arith.truncf %145 : vector<256x32xf32> to vector<256x32xbf16>
    %cst_57 = arith.constant dense<0.000000e+00> : vector<64x32xf32>
    %148 = tpu.matmul %146, %147, %cst_57 {dimension_numbers = #tpu.dot_dimension_numbers<[1], [0], [0], [1], [0, 0, 1, 1], [], []>} : vector<64x256xbf16>, vector<256x32xbf16>, vector<64x32xf32> -> vector<64x32xf32>
    %c0_58 = arith.constant 0 : index
    %c0_59 = arith.constant 0 : index
    %149 = vector.load %arg10[%c0_58, %c0_59] : memref<1x32xf32, #tpu.memory_space<vmem>>, vector<1x32xf32>
    %150 = vector.broadcast %149 : vector<1x32xf32> to vector<64x32xf32>
    %151 = arith.mulf %47, %150 : vector<64x32xf32>
    %152 = arith.addf %148, %151 : vector<64x32xf32>
    %cst_60 = arith.constant 0.000000e+00 : f32
    %153 = vector.broadcast %cst_60 : f32 to vector<64x32xf32>
    %154 = arith.subf %153, %6 : vector<64x32xf32>
    %155 = math.exp %154 : vector<64x32xf32>
    %cst_61 = arith.constant 1.000000e+00 : f32
    %156 = vector.broadcast %cst_61 : f32 to vector<64x32xf32>
    %157 = arith.addf %156, %155 : vector<64x32xf32>
    %158 = tpu.reciprocal %157 {approx = true} : vector<64x32xf32> -> vector<64x32xf32>
    %159 = arith.mulf %6, %158 : vector<64x32xf32>
    %160 = arith.mulf %152, %159 : vector<64x32xf32>
    %c0_62 = arith.constant 0 : index
    %c0_63 = arith.constant 0 : index
    %161 = vector.load %arg11[%c0_62, %c0_63] : memref<32x128xf32, #tpu.memory_space<vmem>>, vector<32x128xf32>
    %162 = arith.truncf %160 : vector<64x32xf32> to vector<64x32xbf16>
    %163 = arith.truncf %161 : vector<32x128xf32> to vector<32x128xbf16>
    %cst_64 = arith.constant dense<0.000000e+00> : vector<64x128xf32>
    %164 = tpu.matmul %162, %163, %cst_64 {dimension_numbers = #tpu.dot_dimension_numbers<[1], [0], [0], [1], [0, 0, 1, 1], [], []>} : vector<64x32xbf16>, vector<32x128xbf16>, vector<64x128xf32> -> vector<64x128xf32>
    %165 = arith.truncf %164 : vector<64x128xf32> to vector<64x128xbf16>
    %c0_65 = arith.constant 0 : index
    %c0_66 = arith.constant 0 : index
    %166 = vector.load %arg12[%c0_65, %c0_66] : memref<64x128xbf16, #tpu.memory_space<vmem>>, vector<64x128xbf16>
    tpu.vector_store %arg12[%c0_65, %c0_66], %165 {strides = array<i32>} : memref<64x128xbf16, #tpu.memory_space<vmem>>, vector<64x128xbf16>,
    return
  }
  func.func @transform_0(%arg0: i32) -> (i32, i32) {
    %c0_i32 = arith.constant 0 : i32
    %c0_i32_0 = arith.constant 0 : i32
    return %arg0, %c0_i32 : i32, i32
  }
  func.func @transform_1(%arg0: i32) -> (i32, i32) {
    %c0_i32 = arith.constant 0 : i32
    %c0_i32_0 = arith.constant 0 : i32
    %c0_i32_1 = arith.constant 0 : i32
    return %c0_i32, %c0_i32_0 : i32, i32
  }
  func.func @transform_2(%arg0: i32) -> (i32, i32) {
    %c0_i32 = arith.constant 0 : i32
    %c0_i32_0 = arith.constant 0 : i32
    %c0_i32_1 = arith.constant 0 : i32
    return %c0_i32, %c0_i32_0 : i32, i32
  }
  func.func @transform_3(%arg0: i32) -> (i32, i32) {
    %c0_i32 = arith.constant 0 : i32
    %c0_i32_0 = arith.constant 0 : i32
    %c0_i32_1 = arith.constant 0 : i32
    return %c0_i32, %c0_i32_0 : i32, i32
  }
  func.func @transform_4(%arg0: i32) -> (i32, i32) {
    %c0_i32 = arith.constant 0 : i32
    %c0_i32_0 = arith.constant 0 : i32
    %c0_i32_1 = arith.constant 0 : i32
    return %c0_i32, %c0_i32_0 : i32, i32
  }
  func.func @transform_5(%arg0: i32) -> (i32, i32) {
    %c0_i32 = arith.constant 0 : i32
    %c0_i32_0 = arith.constant 0 : i32
    %c0_i32_1 = arith.constant 0 : i32
    return %c0_i32, %c0_i32_0 : i32, i32
  }
  func.func @transform_6(%arg0: i32) -> (i32, i32) {
    %c0_i32 = arith.constant 0 : i32
    %c0_i32_0 = arith.constant 0 : i32
    %c0_i32_1 = arith.constant 0 : i32
    return %c0_i32, %c0_i32_0 : i32, i32
  }
  func.func @transform_7(%arg0: i32) -> (i32, i32) {
    %c0_i32 = arith.constant 0 : i32
    %c0_i32_0 = arith.constant 0 : i32
    %c0_i32_1 = arith.constant 0 : i32
    return %c0_i32, %c0_i32_0 : i32, i32
  }
  func.func @transform_8(%arg0: i32) -> (i32, i32) {
    %c0_i32 = arith.constant 0 : i32
    %c0_i32_0 = arith.constant 0 : i32
    %c0_i32_1 = arith.constant 0 : i32
    return %c0_i32, %c0_i32_0 : i32, i32
  }
  func.func @transform_9(%arg0: i32) -> (i32, i32) {
    %c0_i32 = arith.constant 0 : i32
    %c0_i32_0 = arith.constant 0 : i32
    %c0_i32_1 = arith.constant 0 : i32
    return %c0_i32, %c0_i32_0 : i32, i32
  }
  func.func @transform_10(%arg0: i32) -> (i32, i32) {
    %c0_i32 = arith.constant 0 : i32
    %c0_i32_0 = arith.constant 0 : i32
    %c0_i32_1 = arith.constant 0 : i32
    return %c0_i32, %c0_i32_0 : i32, i32
  }
  func.func @transform_11(%arg0: i32) -> (i32, i32) {
    %c0_i32 = arith.constant 0 : i32
    %c0_i32_0 = arith.constant 0 : i32
    return %arg0, %c0_i32 : i32, i32
  }
}

</mosaic_0001>

<llo_original>
// kernel: self_select_process.1
$region0: #{self_select_process.1}
  #allocation0 [shape = 'u32[]', space=smem, size = 0x4, offset = 0x4, fixed_abs, tag = 'smem constant byte address 0x4 - core index']
  #allocation1 [shape = 'u32[144,128]{1,0:T(1,128)}', space=vmem, size = 0x12000, scoped, tag = 'internal scratch']
  %s0 = inlined_call_operand.vmem [shape: f32[128,4], index: 0, kind: input, shape index: {}]
  %s1 = inlined_call_operand.vmem [shape: f32[4,64], index: 1, kind: input, shape index: {}]
  %s2 = inlined_call_operand.vmem [shape: f32[4,32], index: 2, kind: input, shape index: {}]
  %s3 = inlined_call_operand.vmem [shape: f32[1,32], index: 3, kind: input, shape index: {}]
  %s4 = inlined_call_operand.vmem [shape: f32[32,544], index: 4, kind: input, shape index: {}]
  %s5 = inlined_call_operand.vmem [shape: f32[1,32], index: 5, kind: input, shape index: {}]
  %s6 = inlined_call_operand.vmem [shape: f32[32,256], index: 6, kind: input, shape index: {}]
  %s7 = inlined_call_operand.vmem [shape: f32[1,256], index: 7, kind: input, shape index: {}]
  %s8 = inlined_call_operand.vmem [shape: f32[256,32], index: 8, kind: input, shape index: {}]
  %s9 = inlined_call_operand.vmem [shape: f32[1,32], index: 9, kind: input, shape index: {}]
  %s10 = inlined_call_operand.vmem [shape: f32[32,128], index: 10, kind: input, shape index: {}]
  %s11 = inlined_call_operand.vmem [shape: bf16[128,128], index: 11, kind: output, shape index: {}]
  %s12 = sld [smem:[#allocation0]]
  $region77: #{self_select_process.1} parent=0
    _
  %s14 = ssub.s32 1, %s12
  %s15 = scalar_select 0, %s14, %s12
  loop: start=0, step=1, limit=4
  $region2: #{self_select_process.1} parent=0 // loop_pre_header
    _
  $region3: #{self_select_process.1} parent=0 // loop_header
    %s17 = sphi 0, %s21
    %p18 = scmp.ge.s32.totalorder %s17, 4
    %s27 = sphi 0, %s29
    %s30 = sphi 0, %s27
    %s31 = sphi 0, %s30
    %s47 = sphi 0, %s31
    %s51 = sphi 0, %s51
    %s53 = sphi 0, %s51
    %s54 = sphi 0, %s53
    %s68 = sphi 0, %s54
    %s72 = sphi 0, %s72
    %s74 = sphi 0, %s72
    %s75 = sphi 0, %s74
    %s89 = sphi 0, %s75
    %s93 = sphi 0, %s93
    %s95 = sphi 0, %s93
    %s96 = sphi 0, %s95
    %s110 = sphi 0, %s96
    %s114 = sphi 0, %s114
    %s116 = sphi 0, %s114
    %s117 = sphi 0, %s116
    %s131 = sphi 0, %s117
    %s135 = sphi 0, %s135
    %s137 = sphi 0, %s135
    %s138 = sphi 0, %s137
    %s152 = sphi 0, %s138
    %s156 = sphi 0, %s156
    %s158 = sphi 0, %s156
    %s159 = sphi 0, %s158
    %s173 = sphi 0, %s159
    %s177 = sphi 0, %s177
    %s179 = sphi 0, %s177
    %s180 = sphi 0, %s179
    %s194 = sphi 0, %s180
    %s198 = sphi 0, %s198
    %s200 = sphi 0, %s198
    %s201 = sphi 0, %s200
    %s215 = sphi 0, %s201
    %s219 = sphi 0, %s219
    %s221 = sphi 0, %s219
    %s222 = sphi 0, %s221
    %s236 = sphi 0, %s222
    %s240 = sphi 0, %s240
    %s242 = sphi 0, %s240
    %s243 = sphi 0, %s242
    %s257 = sphi 0, %s243
    %s263 = sphi 0, %s265
    %s266 = sphi 0, %s263
    %s267 = sphi 0, %s266
    %s283 = sphi 0, %s267
  $region4: #{self_select_process.1} parent=0 // loop_header_branch
    %20 = sbr.rel (%p18) target = $region8
  $region5: #{self_select_process.1} parent=0 // loop_body
    %s22 = ssub.s32 %s17, 1
    %s23 = ssub.s32 %s17, 2
    %s24 = sadd.s32 %s17, 1
    %s25 = ssub.s32 %s17, %s24
    %p26 = scmp.eq.s32.totalorder %s25, 0
    %s28 = sadd.s32 %s27, 1
    %s29 = scalar_select %p26, %s27, %s28
    %p32 = pneg %p26
    %p33 = scmp.eq.s32.totalorder %s17, 1
    %p34 = por %p32, %p33
    %p35 = scmp.ne.s32.totalorder %s27, %s30
    %p36 = scmp.eq.s32.totalorder %s17, 0
    %p37 = por %p35, %p36
    %p38 = scmp.ne.s32.totalorder %s27, %s30
    %p39 = scmp.eq.s32.totalorder %s22, 1
    %p40 = por %p38, %p39
    %p41 = scmp.ne.s32.totalorder %s30, %s31
    %p42 = scmp.eq.s32.totalorder %s22, 0
    %p43 = por %p41, %p42
    %p44 = scmp.ne.s32.totalorder %s30, %s31
    %p45 = scmp.eq.s32.totalorder %s23, 1
    %p46 = por %p44, %p45
    %p48 = scmp.ne.s32.totalorder %s31, %s47
    %p49 = scmp.eq.s32.totalorder %s23, 0
    %p50 = por %p48, %p49
    %s52 = sadd.s32 %s51, 1
    %p55 = scmp.eq.s32.totalorder %s17, 1
    %p56 = scmp.ne.s32.totalorder %s51, %s53
    %p57 = scmp.eq.s32.totalorder %s17, 0
    %p58 = por %p56, %p57
    %p59 = scmp.ne.s32.totalorder %s51, %s53
    %p60 = scmp.eq.s32.totalorder %s22, 1
    %p61 = por %p59, %p60
    %p62 = scmp.ne.s32.totalorder %s53, %s54
    %p63 = scmp.eq.s32.totalorder %s22, 0
    %p64 = por %p62, %p63
    %p65 = scmp.ne.s32.totalorder %s53, %s54
    %p66 = scmp.eq.s32.totalorder %s23, 1
    %p67 = por %p65, %p66
    %p69 = scmp.ne.s32.totalorder %s54, %s68
    %p70 = scmp.eq.s32.totalorder %s23, 0
    %p71 = por %p69, %p70
    %s73 = sadd.s32 %s72, 1
    %p76 = scmp.eq.s32.totalorder %s17, 1
    %p77 = scmp.ne.s32.totalorder %s72, %s74
    %p78 = scmp.eq.s32.totalorder %s17, 0
    %p79 = por %p77, %p78
    %p80 = scmp.ne.s32.totalorder %s72, %s74
    %p81 = scmp.eq.s32.totalorder %s22, 1
    %p82 = por %p80, %p81
    %p83 = scmp.ne.s32.totalorder %s74, %s75
    %p84 = scmp.eq.s32.totalorder %s22, 0
    %p85 = por %p83, %p84
    %p86 = scmp.ne.s32.totalorder %s74, %s75
    %p87 = scmp.eq.s32.totalorder %s23, 1
    %p88 = por %p86, %p87
    %p90 = scmp.ne.s32.totalorder %s75, %s89
    %p91 = scmp.eq.s32.totalorder %s23, 0
    %p92 = por %p90, %p91
    %s94 = sadd.s32 %s93, 1
    %p97 = scmp.eq.s32.totalorder %s17, 1
    %p98 = scmp.ne.s32.totalorder %s93, %s95
    %p99 = scmp.eq.s32.totalorder %s17, 0
    %p100 = por %p98, %p99
    %p101 = scmp.ne.s32.totalorder %s93, %s95
    %p102 = scmp.eq.s32.totalorder %s22, 1
    %p103 = por %p101, %p102
    %p104 = scmp.ne.s32.totalorder %s95, %s96
    %p105 = scmp.eq.s32.totalorder %s22, 0
    %p106 = por %p104, %p105
    %p107 = scmp.ne.s32.totalorder %s95, %s96
    %p108 = scmp.eq.s32.totalorder %s23, 1
    %p109 = por %p107, %p108
    %p111 = scmp.ne.s32.totalorder %s96, %s110
    %p112 = scmp.eq.s32.totalorder %s23, 0
    %p113 = por %p111, %p112
    %s115 = sadd.s32 %s114, 1
    %p118 = scmp.eq.s32.totalorder %s17, 1
    %p119 = scmp.ne.s32.totalorder %s114, %s116
    %p120 = scmp.eq.s32.totalorder %s17, 0
    %p121 = por %p119, %p120
    %p122 = scmp.ne.s32.totalorder %s114, %s116
    %p123 = scmp.eq.s32.totalorder %s22, 1
    %p124 = por %p122, %p123
    %p125 = scmp.ne.s32.totalorder %s116, %s117
    %p126 = scmp.eq.s32.totalorder %s22, 0
    %p127 = por %p125, %p126
    %p128 = scmp.ne.s32.totalorder %s116, %s117
    %p129 = scmp.eq.s32.totalorder %s23, 1
    %p130 = por %p128, %p129
    %p132 = scmp.ne.s32.totalorder %s117, %s131
    %p133 = scmp.eq.s32.totalorder %s23, 0
    %p134 = por %p132, %p133
    %s136 = sadd.s32 %s135, 1
    %p139 = scmp.eq.s32.totalorder %s17, 1
    %p140 = scmp.ne.s32.totalorder %s135, %s137
    %p141 = scmp.eq.s32.totalorder %s17, 0
    %p142 = por %p140, %p141
    %p143 = scmp.ne.s32.totalorder %s135, %s137
    %p144 = scmp.eq.s32.totalorder %s22, 1
    %p145 = por %p143, %p144
    %p146 = scmp.ne.s32.totalorder %s137, %s138
    %p147 = scmp.eq.s32.totalorder %s22, 0
    %p148 = por %p146, %p147
    %p149 = scmp.ne.s32.totalorder %s137, %s138
    %p150 = scmp.eq.s32.totalorder %s23, 1
    %p151 = por %p149, %p150
    %p153 = scmp.ne.s32.totalorder %s138, %s152
    %p154 = scmp.eq.s32.totalorder %s23, 0
    %p155 = por %p153, %p154
    %s157 = sadd.s32 %s156, 1
    %p160 = scmp.eq.s32.totalorder %s17, 1
    %p161 = scmp.ne.s32.totalorder %s156, %s158
    %p162 = scmp.eq.s32.totalorder %s17, 0
    %p163 = por %p161, %p162
    %p164 = scmp.ne.s32.totalorder %s156, %s158
    %p165 = scmp.eq.s32.totalorder %s22, 1
    %p166 = por %p164, %p165
    %p167 = scmp.ne.s32.totalorder %s158, %s159
    %p168 = scmp.eq.s32.totalorder %s22, 0
    %p169 = por %p167, %p168
    %p170 = scmp.ne.s32.totalorder %s158, %s159
    %p171 = scmp.eq.s32.totalorder %s23, 1
    %p172 = por %p170, %p171
    %p174 = scmp.ne.s32.totalorder %s159, %s173
    %p175 = scmp.eq.s32.totalorder %s23, 0
    %p176 = por %p174, %p175
    %s178 = sadd.s32 %s177, 1
    %p181 = scmp.eq.s32.totalorder %s17, 1
    %p182 = scmp.ne.s32.totalorder %s177, %s179
    %p183 = scmp.eq.s32.totalorder %s17, 0
    %p184 = por %p182, %p183
    %p185 = scmp.ne.s32.totalorder %s177, %s179
    %p186 = scmp.eq.s32.totalorder %s22, 1
    %p187 = por %p185, %p186
    %p188 = scmp.ne.s32.totalorder %s179, %s180
    %p189 = scmp.eq.s32.totalorder %s22, 0
    %p190 = por %p188, %p189
    %p191 = scmp.ne.s32.totalorder %s179, %s180
    %p192 = scmp.eq.s32.totalorder %s23, 1
    %p193 = por %p191, %p192
    %p195 = scmp.ne.s32.totalorder %s180, %s194
    %p196 = scmp.eq.s32.totalorder %s23, 0
    %p197 = por %p195, %p196
    %s199 = sadd.s32 %s198, 1
    %p202 = scmp.eq.s32.totalorder %s17, 1
    %p203 = scmp.ne.s32.totalorder %s198, %s200
    %p204 = scmp.eq.s32.totalorder %s17, 0
    %p205 = por %p203, %p204
    %p206 = scmp.ne.s32.totalorder %s198, %s200
    %p207 = scmp.eq.s32.totalorder %s22, 1
    %p208 = por %p206, %p207
    %p209 = scmp.ne.s32.totalorder %s200, %s201
    %p210 = scmp.eq.s32.totalorder %s22, 0
    %p211 = por %p209, %p210
    %p212 = scmp.ne.s32.totalorder %s200, %s201
    %p213 = scmp.eq.s32.totalorder %s23, 1
    %p214 = por %p212, %p213
    %p216 = scmp.ne.s32.totalorder %s201, %s215
    %p217 = scmp.eq.s32.totalorder %s23, 0
    %p218 = por %p216, %p217
    %s220 = sadd.s32 %s219, 1
    %p223 = scmp.eq.s32.totalorder %s17, 1
    %p224 = scmp.ne.s32.totalorder %s219, %s221
    %p225 = scmp.eq.s32.totalorder %s17, 0
    %p226 = por %p224, %p225
    %p227 = scmp.ne.s32.totalorder %s219, %s221
    %p228 = scmp.eq.s32.totalorder %s22, 1
    %p229 = por %p227, %p228
    %p230 = scmp.ne.s32.totalorder %s221, %s222
    %p231 = scmp.eq.s32.totalorder %s22, 0
    %p232 = por %p230, %p231
    %p233 = scmp.ne.s32.totalorder %s221, %s222
    %p234 = scmp.eq.s32.totalorder %s23, 1
    %p235 = por %p233, %p234
    %p237 = scmp.ne.s32.totalorder %s222, %s236
    %p238 = scmp.eq.s32.totalorder %s23, 0
    %p239 = por %p237, %p238
    %s241 = sadd.s32 %s240, 1
    %p244 = scmp.eq.s32.totalorder %s17, 1
    %p245 = scmp.ne.s32.totalorder %s240, %s242
    %p246 = scmp.eq.s32.totalorder %s17, 0
    %p247 = por %p245, %p246
    %p248 = scmp.ne.s32.totalorder %s240, %s242
    %p249 = scmp.eq.s32.totalorder %s22, 1
    %p250 = por %p248, %p249
    %p251 = scmp.ne.s32.totalorder %s242, %s243
    %p252 = scmp.eq.s32.totalorder %s22, 0
    %p253 = por %p251, %p252
    %p254 = scmp.ne.s32.totalorder %s242, %s243
    %p255 = scmp.eq.s32.totalorder %s23, 1
    %p256 = por %p254, %p255
    %p258 = scmp.ne.s32.totalorder %s243, %s257
    %p259 = scmp.eq.s32.totalorder %s23, 0
    %p260 = por %p258, %p259
    %s261 = ssub.s32 %s17, %s24
    %p262 = scmp.eq.s32.totalorder %s261, 0
    %s264 = sadd.s32 %s263, 1
    %s265 = scalar_select %p262, %s263, %s264
    %p268 = pneg %p262
    %p269 = scmp.eq.s32.totalorder %s17, 1
    %p270 = por %p268, %p269
    %p271 = scmp.ne.s32.totalorder %s263, %s266
    %p272 = scmp.eq.s32.totalorder %s17, 0
    %p273 = por %p271, %p272
    %p274 = scmp.ne.s32.totalorder %s263, %s266
    %p275 = scmp.eq.s32.totalorder %s22, 1
    %p276 = por %p274, %p275
    %p277 = scmp.ne.s32.totalorder %s266, %s267
    %p278 = scmp.eq.s32.totalorder %s22, 0
    %p279 = por %p277, %p278
    %p280 = scmp.ne.s32.totalorder %s266, %s267
    %p281 = scmp.eq.s32.totalorder %s23, 1
    %p282 = por %p280, %p281
    %p284 = scmp.ne.s32.totalorder %s267, %s283
    %p285 = scmp.eq.s32.totalorder %s23, 0
    %p286 = por %p284, %p285
    %p287 = scmp.le.s32.totalorder 1, %s17
    %p288 = scmp.lt.s32.totalorder %s17, 3
    %p289 = pnand %p287, %p288
    %p290 = pneg %p289
    // Predicated region
    $region9: #{self_select_process.1} parent=5 // pred_check
      _
    $region10: #{self_select_process.1} parent=5 // pred_check_branch
      %292 = sbr.rel (%p289) target = $region12
    $region11: #{self_select_process.1} parent=5 // pred_region
      %s293 = ssub.s32 %s17, 1
      // Predicated region
      $region13: #{self_select_process.1} parent=11 // pred_check
        %p294 = pneg %p64
      $region14: #{self_select_process.1} parent=11 // pred_check_branch
        %296 = sbr.rel (%p294) target = $region16
      $region15: #{self_select_process.1} parent=11 // pred_region
        _
      $region16: #{self_select_process.1} parent=11 // pred_fallthru
        _
      // Predicated region
      $region17: #{self_select_process.1} parent=11 // pred_check
        %p297 = pneg %p85
      $region18: #{self_select_process.1} parent=11 // pred_check_branch
        %299 = sbr.rel (%p297) target = $region20
      $region19: #{self_select_process.1} parent=11 // pred_region
        _
      $region20: #{self_select_process.1} parent=11 // pred_fallthru
        _
      // Predicated region
      $region21: #{self_select_process.1} parent=11 // pred_check
        %p300 = pneg %p106
      $region22: #{self_select_process.1} parent=11 // pred_check_branch
        %302 = sbr.rel (%p300) target = $region24
      $region23: #{self_select_process.1} parent=11 // pred_region
        _
      $region24: #{self_select_process.1} parent=11 // pred_fallthru
        _
      // Predicated region
      $region25: #{self_select_process.1} parent=11 // pred_check
        %p303 = pneg %p127
      $region26: #{self_select_process.1} parent=11 // pred_check_branch
        %305 = sbr.rel (%p303) target = $region28
      $region27: #{self_select_process.1} parent=11 // pred_region
        _
      $region28: #{self_select_process.1} parent=11 // pred_fallthru
        _
      // Predicated region
      $region29: #{self_select_process.1} parent=11 // pred_check
        %p306 = pneg %p148
      $region30: #{self_select_process.1} parent=11 // pred_check_branch
        %308 = sbr.rel (%p306) target = $region32
      $region31: #{self_select_process.1} parent=11 // pred_region
        _
      $region32: #{self_select_process.1} parent=11 // pred_fallthru
        _
      // Predicated region
      $region33: #{self_select_process.1} parent=11 // pred_check
        %p309 = pneg %p169
      $region34: #{self_select_process.1} parent=11 // pred_check_branch
        %311 = sbr.rel (%p309) target = $region36
      $region35: #{self_select_process.1} parent=11 // pred_region
        _
      $region36: #{self_select_process.1} parent=11 // pred_fallthru
        _
      // Predicated region
      $region37: #{self_select_process.1} parent=11 // pred_check
        %p312 = pneg %p190
      $region38: #{self_select_process.1} parent=11 // pred_check_branch
        %314 = sbr.rel (%p312) target = $region40
      $region39: #{self_select_process.1} parent=11 // pred_region
        _
      $region40: #{self_select_process.1} parent=11 // pred_fallthru
        _
      // Predicated region
      $region41: #{self_select_process.1} parent=11 // pred_check
        %p315 = pneg %p211
      $region42: #{self_select_process.1} parent=11 // pred_check_branch
        %317 = sbr.rel (%p315) target = $region44
      $region43: #{self_select_process.1} parent=11 // pred_region
        _
      $region44: #{self_select_process.1} parent=11 // pred_fallthru
        _
      // Predicated region
      $region45: #{self_select_process.1} parent=11 // pred_check
        %p318 = pneg %p232
      $region46: #{self_select_process.1} parent=11 // pred_check_branch
        %320 = sbr.rel (%p318) target = $region48
      $region47: #{self_select_process.1} parent=11 // pred_region
        _
      $region48: #{self_select_process.1} parent=11 // pred_fallthru
        _
      // Predicated region
      $region49: #{self_select_process.1} parent=11 // pred_check
        %p321 = pneg %p253
      $region50: #{self_select_process.1} parent=11 // pred_check_branch
        %323 = sbr.rel (%p321) target = $region52
      $region51: #{self_select_process.1} parent=11 // pred_region
        _
      $region52: #{self_select_process.1} parent=11 // pred_fallthru
        _
    $region12: #{self_select_process.1} parent=5 // pred_fallthru
      _
    %p324 = scmp.lt.s32.totalorder %s17, 2
    // Predicated region
    $region53: #{self_select_process.1} parent=5 // pred_check
      %p325 = pneg %p324
    $region54: #{self_select_process.1} parent=5 // pred_check_branch
      %327 = sbr.rel (%p325) target = $region56
    $region55: #{self_select_process.1} parent=5 // pred_region
      // Predicated region
      $region57: #{self_select_process.1} parent=55 // pred_check
        %p328 = pneg %p37
      $region58: #{self_select_process.1} parent=55 // pred_check_branch
        %330 = sbr.rel (%p328) target = $region60
      $region59: #{self_select_process.1} parent=55 // pred_region
        %s331 = smul.u32 8, %s17
        %p332 = scmp.lt.s32.totalorder %s331, 15
        %s333 = scalar_select %p332, %s331, 15
        %s334 = smul.addr %s333, 8
        %s335 = scalar_lea.vmem %s0, %s334
        %s336 = smul.u32 8, %s17
      $region60: #{self_select_process.1} parent=55 // pred_fallthru
        _
    $region56: #{self_select_process.1} parent=5 // pred_fallthru
      _
    %p337 = scmp.le.s32.totalorder 1, %s17
    %p338 = scmp.lt.s32.totalorder %s17, 3
    %p339 = pnand %p337, %p338
    %p340 = pneg %p339
    // Predicated region
    $region61: #{self_select_process.1} parent=5 // pred_check
      _
    $region62: #{self_select_process.1} parent=5 // pred_check_branch
      %342 = sbr.rel (%p339) target = $region64
    $region63: #{self_select_process.1} parent=5 // pred_region
      %s343 = ssub.s32 %s17, 1
      %s344 = smul.u32 8, %s22
      %p345 = scmp.lt.s32.totalorder %s344, 15
      %s346 = scalar_select %p345, %s344, 15
      %s347 = smul.addr %s346, 8
      %s348 = scalar_lea.vmem %s0, %s347
      %p349 = pneg %p43
      %p350 = pneg %p40
      %p351 = pneg %p64
      %p352 = pneg %p61
      %p353 = pneg %p85
      %p354 = pneg %p82
      %p355 = pneg %p106
      %p356 = pneg %p103
      %p357 = pneg %p127
      %p358 = pneg %p124
      %p359 = pneg %p148
      %p360 = pneg %p145
      %p361 = pneg %p169
      %p362 = pneg %p166
      %p363 = pneg %p190
      %p364 = pneg %p187
      %p365 = pneg %p211
      %p366 = pneg %p208
      %p367 = pneg %p232
      %p368 = pneg %p229
      %p369 = pneg %p253
      %p370 = pneg %p250
      %p371 = pneg %p279
      %p372 = pneg %p276
      %s373 = smul.u32 8, %s22
      %p374 = scmp.lt.s32.totalorder %s373, 15
      %s375 = scalar_select %p374, %s373, 15
      %s376 = smul.addr %s375, 4
      %s377 = scalar_lea.vmem %s11, %s376
      %s378 = smul.u32 8, %s22
      %p379 = scmp.lt.s32.totalorder %s378, 15
      %s380 = scalar_select %p379, %s378, 15
      %s381 = smul.addr %s380, 8
      %s382 = scalar_lea.vmem %s0, %s381
      %s383 = smul.u32 8, %s22
      %s384 = smul.u32 8, %s22
      %p385 = scmp.lt.s32.totalorder %s384, 15
      %s386 = scalar_select %p385, %s384, 15
      %s387 = smul.addr %s386, 4
      %s388 = scalar_lea.vmem %s11, %s387
      %s389 = smul.u32 8, %s22
      %v391 = vld [vmem:[%s382] sm:$0xff]
      %v392 = vld [vmem:[%s382 + $0x8] sm:$0xff]
      %v393 = vld [vmem:[%s382 + $0x10] sm:$0xff]
      %v394 = vld [vmem:[%s382 + $0x18] sm:$0xff]
      %v395 = vld [vmem:[%s382 + $0x20] sm:$0xff]
      %v396 = vld [vmem:[%s382 + $0x28] sm:$0xff]
      %v397 = vld [vmem:[%s382 + $0x30] sm:$0xff]
      %v398 = vld [vmem:[%s382 + $0x38] sm:$0xff]
      %v399 = vld [vmem:[%s1] sm:$0xf]
      %v400 = vpack.c.bf16 %v392, %v391
      %v401 = vpack.c.bf16 %v394, %v393
      %v402 = vpack.c.bf16 %v396, %v395
      %v403 = vpack.c.bf16 %v398, %v397
      %v404 = vpack.c.bf16 %v399, %v399
      %vm405 = vcmask 31744
      %v407 = vsel %vm405, %v400, 0
      %v410 = vsel %vm405, %v401, 0
      %v413 = vsel %vm405, %v402, 0
      %v416 = vsel %vm405, %v403, 0
      %vm418 = vcmask 1041408
      %v420 = vsel %vm418, %v404, 0
      %422 = vmatprep.subr.bf16.mxu0 0
      %423 = vmatpush1.bf16.msra.mxu0 %v420
      %424 = vmatprep.subr.bf16.mxu0 0
      %425 = vmatpush1.bf16.msra.mxu0 0
      %426 = vmatprep.subr.bf16.mxu0 0
      %427 = vmatpush1.bf16.msra.mxu0 0
      %428 = vmatprep.subr.bf16.mxu0 0
      %429 = vmatpush1.bf16.msra.mxu0 0
      %430 = vmatprep.subr.bf16.mxu0 0
      %431 = vmatpush1.bf16.msra.mxu0 0
      %432 = vmatprep.subr.bf16.mxu0 0
      %433 = vmatpush1.bf16.msra.mxu0 0
      %434 = vmatprep.subr.bf16.mxu0 0
      %435 = vmatpush1.bf16.msra.mxu0 0
      %436 = vmatprep.subr.bf16.mxu0 0
      %437 = vmatpush1.bf16.msra.mxu0 0
      %438 = vmatprep.subr.bf16.mxu0 0
      %439 = vmatpush1.bf16.msra.mxu0 0
      %440 = vmatprep.subr.bf16.mxu0 0
      %441 = vmatpush1.bf16.msra.mxu0 0
      %442 = vmatprep.subr.bf16.mxu0 0
      %443 = vmatpush1.bf16.msra.mxu0 0
      %444 = vmatprep.subr.bf16.mxu0 0
      %445 = vmatpush1.bf16.msra.mxu0 0
      %446 = vmatprep.subr.bf16.mxu0 0
      %447 = vmatpush1.bf16.msra.mxu0 0
      %448 = vmatprep.subr.bf16.mxu0 0
      %449 = vmatpush1.bf16.msra.mxu0 0
      %450 = vmatprep.subr.bf16.mxu0 0
      %451 = vmatpush1.bf16.msra.mxu0 0
      %452 = vmatprep.subr.bf16.mxu0 0
      %453 = vmatpush1.bf16.msra.mxu0 0
      %454 = vmatprep.mubr.bf16.mxu0 0
      %455 = vmatmul.mubr.bf16.gmra.mrb[0].mxu0 %v407
      %v456 = vpop.f32.mrb[0].mxu0
      %v457 = vadd.f32 0.0, %v456
      %v458 = vpop.f32.mrb[0].mxu0
      %v459 = vpop.f32.mrb[0].mxu0
      %v460 = vadd.f32 0.0, %v459
      %v461 = vpop.f32.mrb[0].mxu0
      %462 = vmatprep.mubr.bf16.mxu0 0
      %463 = vmatmul.mubr.bf16.gmra.mrb[0].mxu0 %v410
      %v464 = vpop.f32.mrb[0].mxu0
      %v465 = vadd.f32 0.0, %v464
      %v466 = vpop.f32.mrb[0].mxu0
      %v467 = vpop.f32.mrb[0].mxu0
      %v468 = vadd.f32 0.0, %v467
      %v469 = vpop.f32.mrb[0].mxu0
      %470 = vmatprep.mubr.bf16.mxu0 0
      %471 = vmatmul.mubr.bf16.gmra.mrb[0].mxu0 %v413
      %v472 = vpop.f32.mrb[0].mxu0
      %v473 = vadd.f32 0.0, %v472
      %v474 = vpop.f32.mrb[0].mxu0
      %v475 = vpop.f32.mrb[0].mxu0
      %v476 = vadd.f32 0.0, %v475
      %v477 = vpop.f32.mrb[0].mxu0
      %478 = vmatprep.mubr.bf16.mxu0 0
      %479 = vmatmul.mubr.bf16.gmra.mrb[0].mxu0 %v416
      %v480 = vpop.f32.mrb[0].mxu0
      %v481 = vadd.f32 0.0, %v480
      %v482 = vpop.f32.mrb[0].mxu0
      %v483 = vpop.f32.mrb[0].mxu0
      %v484 = vadd.f32 0.0, %v483
      %v485 = vpop.f32.mrb[0].mxu0
      %486 = vdwg.mxu0
      %v487 = vlaneseq
      %v488 = vshrl.u32 %v487, 7
      %v489 = vadd.s32 %v488, 8
      %v490 = vadd.s32 %v488, 16
      %v491 = vadd.s32 %v488, 24
      %v492 = vadd.s32 %v488, 32
      %v493 = vadd.s32 %v488, 40
      %v494 = vadd.s32 %v488, 48
      %v495 = vadd.s32 %v488, 56
      %v496 = vld [vmem:[%s2 + $0x3] sm:$0x1]
      %v497 = vlaneseq
      %v498 = vshrl.u32 %v497, 7
      %v499 = vsub.s32 0, %v498
      %v500 = vrot.slane %v496, %v499
      %v501 = vmul.f32 %v457, %v500
      %v502 = vmul.f32 %v460, %v500
      %v503 = vmul.f32 %v465, %v500
      %v504 = vmul.f32 %v468, %v500
      %v505 = vmul.f32 %v473, %v500
      %v506 = vmul.f32 %v476, %v500
      %v507 = vmul.f32 %v481, %v500
      %v508 = vmul.f32 %v484, %v500
      %vm509 = vcmp.lt.s32.totalorder %v488, 1
      %vm510 = vcmp.lt.s32.totalorder %v489, 1
      %vm511 = vcmp.lt.s32.totalorder %v490, 1
      %vm512 = vcmp.lt.s32.totalorder %v491, 1
      %vm513 = vcmp.lt.s32.totalorder %v492, 1
      %vm514 = vcmp.lt.s32.totalorder %v493, 1
      %vm515 = vcmp.lt.s32.totalorder %v494, 1
      %vm516 = vcmp.lt.s32.totalorder %v495, 1
      %v517 = vrot.slane %v457, 7
      %v518 = vrot.slane %v460, 7
      %v519 = vrot.slane %v465, 7
      %v520 = vrot.slane %v468, 7
      %v521 = vrot.slane %v473, 7
      %v522 = vrot.slane %v476, 7
      %v523 = vrot.slane %v481, 7
      %v524 = vrot.slane %v484, 7
      %v525 = vsel %vm509, %v523, %v524
      %v526 = vsel %vm509, %v522, %v523
      %v527 = vsel %vm509, %v521, %v522
      %v528 = vsel %vm509, %v520, %v521
      %v529 = vsel %vm509, %v519, %v520
      %v530 = vsel %vm509, %v518, %v519
      %v531 = vsel %vm509, %v517, %v518
      %v532 = vsel %vm509, %v524, %v517
      %v533 = vsel %vm509, 0.0, %v532
      %v534 = vsel %vm510, 0.0, %v531
      %v535 = vsel %vm511, 0.0, %v530
      %v536 = vsel %vm512, 0.0, %v529
      %v537 = vsel %vm513, 0.0, %v528
      %v538 = vsel %vm514, 0.0, %v527
      %v539 = vsel %vm515, 0.0, %v526
      %v540 = vsel %vm516, 0.0, %v525
      %v541 = vld [vmem:[%s2 + $0x2] sm:$0x1]
      %v542 = vlaneseq
      %v543 = vshrl.u32 %v542, 7
      %v544 = vsub.s32 0, %v543
      %v545 = vrot.slane %v541, %v544
      %v546 = vmul.f32 %v533, %v545
      %v547 = vmul.f32 %v534, %v545
      %v548 = vmul.f32 %v535, %v545
      %v549 = vmul.f32 %v536, %v545
      %v550 = vmul.f32 %v537, %v545
      %v551 = vmul.f32 %v538, %v545
      %v552 = vmul.f32 %v539, %v545
      %v553 = vmul.f32 %v540, %v545
      %v554 = vadd.f32 %v501, %v546
      %v555 = vadd.f32 %v502, %v547
      %v556 = vadd.f32 %v503, %v548
      %v557 = vadd.f32 %v504, %v549
      %v558 = vadd.f32 %v505, %v550
      %v559 = vadd.f32 %v506, %v551
      %v560 = vadd.f32 %v507, %v552
      %v561 = vadd.f32 %v508, %v553
      %vm562 = vcmp.lt.s32.totalorder %v488, 2
      %vm563 = vcmp.lt.s32.totalorder %v489, 2
      %vm564 = vcmp.lt.s32.totalorder %v490, 2
      %vm565 = vcmp.lt.s32.totalorder %v491, 2
      %vm566 = vcmp.lt.s32.totalorder %v492, 2
      %vm567 = vcmp.lt.s32.totalorder %v493, 2
      %vm568 = vcmp.lt.s32.totalorder %v494, 2
      %vm569 = vcmp.lt.s32.totalorder %v495, 2
      %v570 = vrot.slane %v457, 6
      %v571 = vrot.slane %v460, 6
      %v572 = vrot.slane %v465, 6
      %v573 = vrot.slane %v468, 6
      %v574 = vrot.slane %v473, 6
      %v575 = vrot.slane %v476, 6
      %v576 = vrot.slane %v481, 6
      %v577 = vrot.slane %v484, 6
      %v578 = vsel %vm562, %v576, %v577
      %v579 = vsel %vm562, %v575, %v576
      %v580 = vsel %vm562, %v574, %v575
      %v581 = vsel %vm562, %v573, %v574
      %v582 = vsel %vm562, %v572, %v573
      %v583 = vsel %vm562, %v571, %v572
      %v584 = vsel %vm562, %v570, %v571
      %v585 = vsel %vm562, %v577, %v570
      %v586 = vsel %vm562, 0.0, %v585
      %v587 = vsel %vm563, 0.0, %v584
      %v588 = vsel %vm564, 0.0, %v583
      %v589 = vsel %vm565, 0.0, %v582
      %v590 = vsel %vm566, 0.0, %v581
      %v591 = vsel %vm567, 0.0, %v580
      %v592 = vsel %vm568, 0.0, %v579
      %v593 = vsel %vm569, 0.0, %v578
      %v594 = vld [vmem:[%s2 + $0x1] sm:$0x1]
      %v595 = vlaneseq
      %v596 = vshrl.u32 %v595, 7
      %v597 = vsub.s32 0, %v596
      %v598 = vrot.slane %v594, %v597
      %v599 = vmul.f32 %v586, %v598
      %v600 = vmul.f32 %v587, %v598
      %v601 = vmul.f32 %v588, %v598
      %v602 = vmul.f32 %v589, %v598
      %v603 = vmul.f32 %v590, %v598
      %v604 = vmul.f32 %v591, %v598
      %v605 = vmul.f32 %v592, %v598
      %v606 = vmul.f32 %v593, %v598
      %v607 = vadd.f32 %v554, %v599
      %v608 = vadd.f32 %v555, %v600
      %v609 = vadd.f32 %v556, %v601
      %v610 = vadd.f32 %v557, %v602
      %v611 = vadd.f32 %v558, %v603
      %v612 = vadd.f32 %v559, %v604
      %v613 = vadd.f32 %v560, %v605
      %v614 = vadd.f32 %v561, %v606
      %vm615 = vcmp.lt.s32.totalorder %v488, 3
      %vm616 = vcmp.lt.s32.totalorder %v489, 3
      %vm617 = vcmp.lt.s32.totalorder %v490, 3
      %vm618 = vcmp.lt.s32.totalorder %v491, 3
      %vm619 = vcmp.lt.s32.totalorder %v492, 3
      %vm620 = vcmp.lt.s32.totalorder %v493, 3
      %vm621 = vcmp.lt.s32.totalorder %v494, 3
      %vm622 = vcmp.lt.s32.totalorder %v495, 3
      %v623 = vrot.slane %v457, 5
      %v624 = vrot.slane %v460, 5
      %v625 = vrot.slane %v465, 5
      %v626 = vrot.slane %v468, 5
      %v627 = vrot.slane %v473, 5
      %v628 = vrot.slane %v476, 5
      %v629 = vrot.slane %v481, 5
      %v630 = vrot.slane %v484, 5
      %v631 = vsel %vm615, %v629, %v630
      %v632 = vsel %vm615, %v628, %v629
      %v633 = vsel %vm615, %v627, %v628
      %v634 = vsel %vm615, %v626, %v627
      %v635 = vsel %vm615, %v625, %v626
      %v636 = vsel %vm615, %v624, %v625
      %v637 = vsel %vm615, %v623, %v624
      %v638 = vsel %vm615, %v630, %v623
      %v639 = vsel %vm615, 0.0, %v638
      %v640 = vsel %vm616, 0.0, %v637
      %v641 = vsel %vm617, 0.0, %v636
      %v642 = vsel %vm618, 0.0, %v635
      %v643 = vsel %vm619, 0.0, %v634
      %v644 = vsel %vm620, 0.0, %v633
      %v645 = vsel %vm621, 0.0, %v632
      %v646 = vsel %vm622, 0.0, %v631
      %v647 = vld [vmem:[%s2] sm:$0x1]
      %v648 = vlaneseq
      %v649 = vshrl.u32 %v648, 7
      %v650 = vsub.s32 0, %v649
      %v651 = vrot.slane %v647, %v650
      %v652 = vmul.f32 %v639, %v651
      %v653 = vmul.f32 %v640, %v651
      %v654 = vmul.f32 %v641, %v651
      %v655 = vmul.f32 %v642, %v651
      %v656 = vmul.f32 %v643, %v651
      %v657 = vmul.f32 %v644, %v651
      %v658 = vmul.f32 %v645, %v651
      %v659 = vmul.f32 %v646, %v651
      %v660 = vadd.f32 %v607, %v652
      %v661 = vadd.f32 %v608, %v653
      %v662 = vadd.f32 %v609, %v654
      %v663 = vadd.f32 %v610, %v655
      %v664 = vadd.f32 %v611, %v656
      %v665 = vadd.f32 %v612, %v657
      %v666 = vadd.f32 %v613, %v658
      %v667 = vadd.f32 %v614, %v659
      %v668 = vld [vmem:[%s3] sm:$0x1]
      %v670 = vlaneseq
      %v671 = vshrl.u32 %v670, 7
      %v672 = vsub.s32 0, %v671
      %v673 = vrot.slane %v668, %v672
      %v675 = vadd.f32 %v660, %v673
      %v676 = vadd.f32 %v661, %v673
      %v677 = vadd.f32 %v662, %v673
      %v678 = vadd.f32 %v663, %v673
      %v679 = vadd.f32 %v664, %v673
      %v680 = vadd.f32 %v665, %v673
      %v681 = vadd.f32 %v666, %v673
      %v682 = vadd.f32 %v667, %v673
      %v683 = vsub.f32 0.0, %v675
      %v684 = vsub.f32 0.0, %v676
      %v685 = vsub.f32 0.0, %v677
      %v686 = vsub.f32 0.0, %v678
      %v687 = vsub.f32 0.0, %v679
      %v688 = vsub.f32 0.0, %v680
      %v689 = vsub.f32 0.0, %v681
      %v690 = vsub.f32 0.0, %v682
      %v691 = vmul.f32 %v683, 1.442695
      %v692 = vpow.pop %v691
      %v693 = vmul.f32 %v684, 1.442695
      %v694 = vpow.pop %v693
      %v695 = vmul.f32 %v685, 1.442695
      %v696 = vpow.pop %v695
      %v697 = vmul.f32 %v686, 1.442695
      %v698 = vpow.pop %v697
      %v699 = vmul.f32 %v687, 1.442695
      %v700 = vpow.pop %v699
      %v701 = vmul.f32 %v688, 1.442695
      %v702 = vpow.pop %v701
      %v703 = vmul.f32 %v689, 1.442695
      %v704 = vpow.pop %v703
      %v705 = vmul.f32 %v690, 1.442695
      %v706 = vpow.pop %v705
      %v707 = vadd.f32 %v692, 1.0
      %v708 = vadd.f32 %v694, 1.0
      %v709 = vadd.f32 %v696, 1.0
      %v710 = vadd.f32 %v698, 1.0
      %v711 = vadd.f32 %v700, 1.0
      %v712 = vadd.f32 %v702, 1.0
      %v713 = vadd.f32 %v704, 1.0
      %v714 = vadd.f32 %v706, 1.0
      %v715 = vrcp.pop %v707
      %v716 = vrcp.pop %v708
      %v717 = vrcp.pop %v709
      %v718 = vrcp.pop %v710
      %v719 = vrcp.pop %v711
      %v720 = vrcp.pop %v712
      %v721 = vrcp.pop %v713
      %v722 = vrcp.pop %v714
      %v723 = vmul.f32 %v675, %v715
      %v724 = vmul.f32 %v676, %v716
      %v725 = vmul.f32 %v677, %v717
      %v726 = vmul.f32 %v678, %v718
      %v727 = vmul.f32 %v679, %v719
      %v728 = vmul.f32 %v680, %v720
      %v729 = vmul.f32 %v681, %v721
      %v730 = vmul.f32 %v682, %v722
      %v731 = vld [vmem:[%s4] sm:$0xff]
      %v732 = vld [vmem:[%s4 + $0x8] sm:$0xff]
      %v733 = vld [vmem:[%s4 + $0x10] sm:$0xff]
      %v734 = vld [vmem:[%s4 + $0x18] sm:$0xff]
      %v735 = vld [vmem:[%s4 + $0x20] sm:$0xff]
      %v736 = vld [vmem:[%s4 + $0x28] sm:$0xff]
      %v737 = vld [vmem:[%s4 + $0x30] sm:$0xff]
      %v738 = vld [vmem:[%s4 + $0x38] sm:$0xff]
      %v739 = vld [vmem:[%s4 + $0x40] sm:$0xff]
      %v740 = vld [vmem:[%s4 + $0x48] sm:$0xff]
      %v741 = vld [vmem:[%s4 + $0x50] sm:$0xff]
      %v742 = vld [vmem:[%s4 + $0x58] sm:$0xff]
      %v743 = vld [vmem:[%s4 + $0x60] sm:$0xff]
      %v744 = vld [vmem:[%s4 + $0x68] sm:$0xff]
      %v745 = vld [vmem:[%s4 + $0x70] sm:$0xff]
      %v746 = vld [vmem:[%s4 + $0x78] sm:$0xff]
      %v747 = vld [vmem:[%s4 + $0x80] sm:$0xff]
      %v748 = vld [vmem:[%s4 + $0x88] sm:$0xff]
      %v749 = vld [vmem:[%s4 + $0x90] sm:$0xff]
      %v750 = vld [vmem:[%s4 + $0x98] sm:$0xff]
      %v751 = vpack.c.bf16 %v724, %v723
      %v752 = vpack.c.bf16 %v726, %v725
      %v753 = vpack.c.bf16 %v728, %v727
      %v754 = vpack.c.bf16 %v730, %v729
      %v755 = vpack.c.bf16 %v736, %v731
      %v756 = vpack.c.bf16 %v737, %v732
      %v757 = vpack.c.bf16 %v738, %v733
      %v758 = vpack.c.bf16 %v739, %v734
      %v759 = vpack.c.bf16 %v740, %v735
      %v760 = vpack.c.bf16 %v746, %v741
      %v761 = vpack.c.bf16 %v747, %v742
      %v762 = vpack.c.bf16 %v748, %v743
      %v763 = vpack.c.bf16 %v749, %v744
      %v764 = vpack.c.bf16 %v750, %v745
      %vm765 = vcmask 261120
      %v767 = vsel %vm765, %v751, 0
      %v770 = vsel %vm765, %v752, 0
      %v773 = vsel %vm765, %v753, 0
      %v776 = vsel %vm765, %v754, 0
      %778 = vmatprep.subr.bf16.mxu0 %v756
      %779 = vmatpush1.bf16.msra.mxu0 %v755
      %780 = vmatprep.subr.bf16.mxu0 %v761
      %781 = vmatpush1.bf16.msra.mxu0 %v760
      %782 = vmatprep.subr.bf16.mxu0 0
      %783 = vmatpush1.bf16.msra.mxu0 0
      %784 = vmatprep.subr.bf16.mxu0 0
      %785 = vmatpush1.bf16.msra.mxu0 0
      %786 = vmatprep.subr.bf16.mxu0 0
      %787 = vmatpush1.bf16.msra.mxu0 0
      %788 = vmatprep.subr.bf16.mxu0 0
      %789 = vmatpush1.bf16.msra.mxu0 0
      %790 = vmatprep.subr.bf16.mxu0 0
      %791 = vmatpush1.bf16.msra.mxu0 0
      %792 = vmatprep.subr.bf16.mxu0 0
      %793 = vmatpush1.bf16.msra.mxu0 0
      %794 = vmatprep.subr.bf16.mxu0 0
      %795 = vmatpush1.bf16.msra.mxu0 0
      %796 = vmatprep.subr.bf16.mxu0 0
      %797 = vmatpush1.bf16.msra.mxu0 0
      %798 = vmatprep.subr.bf16.mxu0 0
      %799 = vmatpush1.bf16.msra.mxu0 0
      %800 = vmatprep.subr.bf16.mxu0 0
      %801 = vmatpush1.bf16.msra.mxu0 0
      %802 = vmatprep.subr.bf16.mxu0 0
      %803 = vmatpush1.bf16.msra.mxu0 0
      %804 = vmatprep.subr.bf16.mxu0 0
      %805 = vmatpush1.bf16.msra.mxu0 0
      %806 = vmatprep.subr.bf16.mxu0 0
      %807 = vmatpush1.bf16.msra.mxu0 0
      %808 = vmatprep.subr.bf16.mxu0 0
      %809 = vmatpush1.bf16.msra.mxu0 0
      %810 = vmatprep.mubr.bf16.mxu0 0
      %811 = vmatmul.mubr.bf16.gmra.mrb[0].mxu0 %v767
      %v812 = vpop.f32.mrb[0].mxu0
      %v813 = vadd.f32 0.0, %v812
      %v814 = vpop.f32.mrb[0].mxu0
      %v815 = vadd.f32 0.0, %v814
      %v816 = vpop.f32.mrb[0].mxu0
      %v817 = vadd.f32 0.0, %v816
      %v818 = vpop.f32.mrb[0].mxu0
      %v819 = vadd.f32 0.0, %v818
      %820 = vmatprep.mubr.bf16.mxu0 0
      %821 = vmatmul.mubr.bf16.gmra.mrb[0].mxu0 %v770
      %v822 = vpop.f32.mrb[0].mxu0
      %v823 = vadd.f32 0.0, %v822
      %v824 = vpop.f32.mrb[0].mxu0
      %v825 = vadd.f32 0.0, %v824
      %v826 = vpop.f32.mrb[0].mxu0
      %v827 = vadd.f32 0.0, %v826
      %v828 = vpop.f32.mrb[0].mxu0
      %v829 = vadd.f32 0.0, %v828
      %830 = vmatprep.mubr.bf16.mxu0 0
      %831 = vmatmul.mubr.bf16.gmra.mrb[0].mxu0 %v773
      %v832 = vpop.f32.mrb[0].mxu0
      %v833 = vadd.f32 0.0, %v832
      %v834 = vpop.f32.mrb[0].mxu0
      %v835 = vadd.f32 0.0, %v834
      %v836 = vpop.f32.mrb[0].mxu0
      %v837 = vadd.f32 0.0, %v836
      %v838 = vpop.f32.mrb[0].mxu0
      %v839 = vadd.f32 0.0, %v838
      %840 = vmatprep.mubr.bf16.mxu0 0
      %841 = vmatmul.mubr.bf16.gmra.mrb[0].mxu0 %v776
      %v842 = vpop.f32.mrb[0].mxu0
      %v843 = vadd.f32 0.0, %v842
      %v844 = vpop.f32.mrb[0].mxu0
      %v845 = vadd.f32 0.0, %v844
      %v846 = vpop.f32.mrb[0].mxu0
      %v847 = vadd.f32 0.0, %v846
      %v848 = vpop.f32.mrb[0].mxu0
      %v849 = vadd.f32 0.0, %v848
      %850 = vdwg.mxu0
      %851 = vmatprep.subr.bf16.mxu0 %v758
      %852 = vmatpush1.bf16.msra.mxu0 %v757
      %853 = vmatprep.subr.bf16.mxu0 %v763
      %854 = vmatpush1.bf16.msra.mxu0 %v762
      %855 = vmatprep.subr.bf16.mxu0 0
      %856 = vmatpush1.bf16.msra.mxu0 0
      %857 = vmatprep.subr.bf16.mxu0 0
      %858 = vmatpush1.bf16.msra.mxu0 0
      %859 = vmatprep.subr.bf16.mxu0 0
      %860 = vmatpush1.bf16.msra.mxu0 0
      %861 = vmatprep.subr.bf16.mxu0 0
      %862 = vmatpush1.bf16.msra.mxu0 0
      %863 = vmatprep.subr.bf16.mxu0 0
      %864 = vmatpush1.bf16.msra.mxu0 0
      %865 = vmatprep.subr.bf16.mxu0 0
      %866 = vmatpush1.bf16.msra.mxu0 0
      %867 = vmatprep.subr.bf16.mxu0 0
      %868 = vmatpush1.bf16.msra.mxu0 0
      %869 = vmatprep.subr.bf16.mxu0 0
      %870 = vmatpush1.bf16.msra.mxu0 0
      %871 = vmatprep.subr.bf16.mxu0 0
      %872 = vmatpush1.bf16.msra.mxu0 0
      %873 = vmatprep.subr.bf16.mxu0 0
      %874 = vmatpush1.bf16.msra.mxu0 0
      %875 = vmatprep.subr.bf16.mxu0 0
      %876 = vmatpush1.bf16.msra.mxu0 0
      %877 = vmatprep.subr.bf16.mxu0 0
      %878 = vmatpush1.bf16.msra.mxu0 0
      %879 = vmatprep.subr.bf16.mxu0 0
      %880 = vmatpush1.bf16.msra.mxu0 0
      %881 = vmatprep.subr.bf16.mxu0 0
      %882 = vmatpush1.bf16.msra.mxu0 0
      %883 = vmatprep.mubr.bf16.mxu0 0
      %884 = vmatmul.mubr.bf16.gmra.mrb[0].mxu0 %v767
      %v885 = vpop.f32.mrb[0].mxu0
      %v886 = vadd.f32 0.0, %v885
      %v887 = vpop.f32.mrb[0].mxu0
      %v888 = vadd.f32 0.0, %v887
      %v889 = vpop.f32.mrb[0].mxu0
      %v890 = vadd.f32 0.0, %v889
      %v891 = vpop.f32.mrb[0].mxu0
      %v892 = vadd.f32 0.0, %v891
      %893 = vmatprep.mubr.bf16.mxu0 0
      %894 = vmatmul.mubr.bf16.gmra.mrb[0].mxu0 %v770
      %v895 = vpop.f32.mrb[0].mxu0
      %v896 = vadd.f32 0.0, %v895
      %v897 = vpop.f32.mrb[0].mxu0
      %v898 = vadd.f32 0.0, %v897
      %v899 = vpop.f32.mrb[0].mxu0
      %v900 = vadd.f32 0.0, %v899
      %v901 = vpop.f32.mrb[0].mxu0
      %v902 = vadd.f32 0.0, %v901
      %903 = vmatprep.mubr.bf16.mxu0 0
      %904 = vmatmul.mubr.bf16.gmra.mrb[0].mxu0 %v773
      %v905 = vpop.f32.mrb[0].mxu0
      %v906 = vadd.f32 0.0, %v905
      %v907 = vpop.f32.mrb[0].mxu0
      %v908 = vadd.f32 0.0, %v907
      %v909 = vpop.f32.mrb[0].mxu0
      %v910 = vadd.f32 0.0, %v909
      %v911 = vpop.f32.mrb[0].mxu0
      %v912 = vadd.f32 0.0, %v911
      %913 = vmatprep.mubr.bf16.mxu0 0
      %914 = vmatmul.mubr.bf16.gmra.mrb[0].mxu0 %v776
      %v915 = vpop.f32.mrb[0].mxu0
      %v916 = vadd.f32 0.0, %v915
      %v917 = vpop.f32.mrb[0].mxu0
      %v918 = vadd.f32 0.0, %v917
      %v919 = vpop.f32.mrb[0].mxu0
      %v920 = vadd.f32 0.0, %v919
      %v921 = vpop.f32.mrb[0].mxu0
      %v922 = vadd.f32 0.0, %v921
      %923 = vdwg.mxu0
      %924 = vmatprep.subr.bf16.mxu0 0
      %925 = vmatpush1.bf16.msra.mxu0 %v759
      %926 = vmatprep.subr.bf16.mxu0 0
      %927 = vmatpush1.bf16.msra.mxu0 %v764
      %928 = vmatprep.subr.bf16.mxu0 0
      %929 = vmatpush1.bf16.msra.mxu0 0
      %930 = vmatprep.subr.bf16.mxu0 0
      %931 = vmatpush1.bf16.msra.mxu0 0
      %932 = vmatprep.subr.bf16.mxu0 0
      %933 = vmatpush1.bf16.msra.mxu0 0
      %934 = vmatprep.subr.bf16.mxu0 0
      %935 = vmatpush1.bf16.msra.mxu0 0
      %936 = vmatprep.subr.bf16.mxu0 0
      %937 = vmatpush1.bf16.msra.mxu0 0
      %938 = vmatprep.subr.bf16.mxu0 0
      %939 = vmatpush1.bf16.msra.mxu0 0
      %940 = vmatprep.subr.bf16.mxu0 0
      %941 = vmatpush1.bf16.msra.mxu0 0
      %942 = vmatprep.subr.bf16.mxu0 0
      %943 = vmatpush1.bf16.msra.mxu0 0
      %944 = vmatprep.subr.bf16.mxu0 0
      %945 = vmatpush1.bf16.msra.mxu0 0
      %946 = vmatprep.subr.bf16.mxu0 0
      %947 = vmatpush1.bf16.msra.mxu0 0
      %948 = vmatprep.subr.bf16.mxu0 0
      %949 = vmatpush1.bf16.msra.mxu0 0
      %950 = vmatprep.subr.bf16.mxu0 0
      %951 = vmatpush1.bf16.msra.mxu0 0
      %952 = vmatprep.subr.bf16.mxu0 0
      %953 = vmatpush1.bf16.msra.mxu0 0
      %954 = vmatprep.subr.bf16.mxu0 0
      %955 = vmatpush1.bf16.msra.mxu0 0
      %956 = vmatprep.mubr.bf16.mxu0 0
      %957 = vmatmul.mubr.bf16.gmra.mrb[0].mxu0 %v767
      %v958 = vpop.f32.mrb[0].mxu0
      %v959 = vadd.f32 0.0, %v958
      %v960 = vpop.f32.mrb[0].mxu0
      %v961 = vpop.f32.mrb[0].mxu0
      %v962 = vadd.f32 0.0, %v961
      %v963 = vpop.f32.mrb[0].mxu0
      %964 = vmatprep.mubr.bf16.mxu0 0
      %965 = vmatmul.mubr.bf16.gmra.mrb[0].mxu0 %v770
      %v966 = vpop.f32.mrb[0].mxu0
      %v967 = vadd.f32 0.0, %v966
      %v968 = vpop.f32.mrb[0].mxu0
      %v969 = vpop.f32.mrb[0].mxu0
      %v970 = vadd.f32 0.0, %v969
      %v971 = vpop.f32.mrb[0].mxu0
      %972 = vmatprep.mubr.bf16.mxu0 0
      %973 = vmatmul.mubr.bf16.gmra.mrb[0].mxu0 %v773
      %v974 = vpop.f32.mrb[0].mxu0
      %v975 = vadd.f32 0.0, %v974
      %v976 = vpop.f32.mrb[0].mxu0
      %v977 = vpop.f32.mrb[0].mxu0
      %v978 = vadd.f32 0.0, %v977
      %v979 = vpop.f32.mrb[0].mxu0
      %980 = vmatprep.mubr.bf16.mxu0 0
      %981 = vmatmul.mubr.bf16.gmra.mrb[0].mxu0 %v776
      %v982 = vpop.f32.mrb[0].mxu0
      %v983 = vadd.f32 0.0, %v982
      %v984 = vpop.f32.mrb[0].mxu0
      %v985 = vpop.f32.mrb[0].mxu0
      %v986 = vadd.f32 0.0, %v985
      %v987 = vpop.f32.mrb[0].mxu0
      %988 = vdwg.mxu0
      %v989 = vld [vmem:[%s5] sm:$0x1]
      %v991 = vlaneseq
      %v992 = vshrl.u32 %v991, 7
      %v993 = vsub.s32 0, %v992
      %v994 = vrot.slane %v989, %v993
      %v996 = vadd.f32 %v959, %v994
      %v997 = vadd.f32 %v962, %v994
      %v998 = vadd.f32 %v967, %v994
      %v999 = vadd.f32 %v970, %v994
      %v1000 = vadd.f32 %v975, %v994
      %v1001 = vadd.f32 %v978, %v994
      %v1002 = vadd.f32 %v983, %v994
      %v1003 = vadd.f32 %v986, %v994
      %v1004 = vmax.f32 %v996, 0.0
      %v1005 = vmax.f32 %v997, 0.0
      %v1006 = vmax.f32 %v998, 0.0
      %v1007 = vmax.f32 %v999, 0.0
      %v1008 = vmax.f32 %v1000, 0.0
      %v1009 = vmax.f32 %v1001, 0.0
      %v1010 = vmax.f32 %v1002, 0.0
      %v1011 = vmax.f32 %v1003, 0.0
      %v1012 = vand.u32 2147483647, %v996
      %v1013 = vand.u32 2147483647, %v997
      %v1014 = vand.u32 2147483647, %v998
      %v1015 = vand.u32 2147483647, %v999
      %v1016 = vand.u32 2147483647, %v1000
      %v1017 = vand.u32 2147483647, %v1001
      %v1018 = vand.u32 2147483647, %v1002
      %v1019 = vand.u32 2147483647, %v1003
      %v1020 = vsub.f32 0.0, %v1012
      %v1021 = vsub.f32 0.0, %v1013
      %v1022 = vsub.f32 0.0, %v1014
      %v1023 = vsub.f32 0.0, %v1015
      %v1024 = vsub.f32 0.0, %v1016
      %v1025 = vsub.f32 0.0, %v1017
      %v1026 = vsub.f32 0.0, %v1018
      %v1027 = vsub.f32 0.0, %v1019
      %v1028 = vmul.f32 %v1020, 1.442695
      %v1029 = vpow.pop %v1028
      %v1030 = vmul.f32 %v1021, 1.442695
      %v1031 = vpow.pop %v1030
      %v1032 = vmul.f32 %v1022, 1.442695
      %v1033 = vpow.pop %v1032
      %v1034 = vmul.f32 %v1023, 1.442695
      %v1035 = vpow.pop %v1034
      %v1036 = vmul.f32 %v1024, 1.442695
      %v1037 = vpow.pop %v1036
      %v1038 = vmul.f32 %v1025, 1.442695
      %v1039 = vpow.pop %v1038
      %v1040 = vmul.f32 %v1026, 1.442695
      %v1041 = vpow.pop %v1040
      %v1042 = vmul.f32 %v1027, 1.442695
      %v1043 = vpow.pop %v1042
      %v1044 = vadd.f32 %v1029, 1.0
      %v1045 = vadd.f32 %v1031, 1.0
      %v1046 = vadd.f32 %v1033, 1.0
      %v1047 = vadd.f32 %v1035, 1.0
      %v1048 = vadd.f32 %v1037, 1.0
      %v1049 = vadd.f32 %v1039, 1.0
      %v1050 = vadd.f32 %v1041, 1.0
      %v1051 = vadd.f32 %v1043, 1.0
      %v1052 = vlog2.pop %v1044
      %v1053 = vmul.f32 %v1052, 0.6931472
      %v1054 = vlog2.pop %v1045
      %v1055 = vmul.f32 %v1054, 0.6931472
      %v1056 = vlog2.pop %v1046
      %v1057 = vmul.f32 %v1056, 0.6931472
      %v1058 = vlog2.pop %v1047
      %v1059 = vmul.f32 %v1058, 0.6931472
      %v1060 = vlog2.pop %v1048
      %v1061 = vmul.f32 %v1060, 0.6931472
      %v1062 = vlog2.pop %v1049
      %v1063 = vmul.f32 %v1062, 0.6931472
      %v1064 = vlog2.pop %v1050
      %v1065 = vmul.f32 %v1064, 0.6931472
      %v1066 = vlog2.pop %v1051
      %v1067 = vmul.f32 %v1066, 0.6931472
      %v1068 = vadd.f32 %v1004, %v1053
      %v1069 = vadd.f32 %v1005, %v1055
      %v1070 = vadd.f32 %v1006, %v1057
      %v1071 = vadd.f32 %v1007, %v1059
      %v1072 = vadd.f32 %v1008, %v1061
      %v1073 = vadd.f32 %v1009, %v1063
      %v1074 = vadd.f32 %v1010, %v1065
      %v1075 = vadd.f32 %v1011, %v1067
      %v1076 = vmul.f32 %v1068, %v723
      %v1077 = vmul.f32 %v1069, %v724
      %v1078 = vmul.f32 %v1070, %v725
      %v1079 = vmul.f32 %v1071, %v726
      %v1080 = vmul.f32 %v1072, %v727
      %v1081 = vmul.f32 %v1073, %v728
      %v1082 = vmul.f32 %v1074, %v729
      %v1083 = vmul.f32 %v1075, %v730
      %v1084 = vld [vmem:[%s6] sm:$0xff]
      %v1085 = vld [vmem:[%s6 + $0x8] sm:$0xff]
      %v1086 = vld [vmem:[%s6 + $0x10] sm:$0xff]
      %v1087 = vld [vmem:[%s6 + $0x18] sm:$0xff]
      %v1088 = vld [vmem:[%s6 + $0x20] sm:$0xff]
      %v1089 = vld [vmem:[%s6 + $0x28] sm:$0xff]
      %v1090 = vld [vmem:[%s6 + $0x30] sm:$0xff]
      %v1091 = vld [vmem:[%s6 + $0x38] sm:$0xff]
      %v1092 = vpack.c.bf16 %v1069, %v1068
      %v1093 = vpack.c.bf16 %v1071, %v1070
      %v1094 = vpack.c.bf16 %v1073, %v1072
      %v1095 = vpack.c.bf16 %v1075, %v1074
      %v1096 = vpack.c.bf16 %v1077, %v1076
      %v1097 = vpack.c.bf16 %v1079, %v1078
      %v1098 = vpack.c.bf16 %v1081, %v1080
      %v1099 = vpack.c.bf16 %v1083, %v1082
      %v1100 = vpack.c.bf16 %v1086, %v1084
      %v1101 = vpack.c.bf16 %v1087, %v1085
      %v1102 = vpack.c.bf16 %v1090, %v1088
      %v1103 = vpack.c.bf16 %v1091, %v1089
      %v1105 = vsel %vm765, %v1092, 0
      %v1108 = vsel %vm765, %v1093, 0
      %v1111 = vsel %vm765, %v1094, 0
      %v1114 = vsel %vm765, %v1095, 0
      %v1117 = vsel %vm765, %v1096, 0
      %v1120 = vsel %vm765, %v1097, 0
      %v1123 = vsel %vm765, %v1098, 0
      %v1126 = vsel %vm765, %v1099, 0
      %1128 = vmatprep.subr.bf16.mxu0 %v1101
      %1129 = vmatpush1.bf16.msra.mxu0 %v1100
      %1130 = vmatprep.subr.bf16.mxu0 %v1103
      %1131 = vmatpush1.bf16.msra.mxu0 %v1102
      %1132 = vmatprep.subr.bf16.mxu0 0
      %1133 = vmatpush1.bf16.msra.mxu0 0
      %1134 = vmatprep.subr.bf16.mxu0 0
      %1135 = vmatpush1.bf16.msra.mxu0 0
      %1136 = vmatprep.subr.bf16.mxu0 0
      %1137 = vmatpush1.bf16.msra.mxu0 0
      %1138 = vmatprep.subr.bf16.mxu0 0
      %1139 = vmatpush1.bf16.msra.mxu0 0
      %1140 = vmatprep.subr.bf16.mxu0 0
      %1141 = vmatpush1.bf16.msra.mxu0 0
      %1142 = vmatprep.subr.bf16.mxu0 0
      %1143 = vmatpush1.bf16.msra.mxu0 0
      %1144 = vmatprep.subr.bf16.mxu0 0
      %1145 = vmatpush1.bf16.msra.mxu0 0
      %1146 = vmatprep.subr.bf16.mxu0 0
      %1147 = vmatpush1.bf16.msra.mxu0 0
      %1148 = vmatprep.subr.bf16.mxu0 0
      %1149 = vmatpush1.bf16.msra.mxu0 0
      %1150 = vmatprep.subr.bf16.mxu0 0
      %1151 = vmatpush1.bf16.msra.mxu0 0
      %1152 = vmatprep.subr.bf16.mxu0 0
      %1153 = vmatpush1.bf16.msra.mxu0 0
      %1154 = vmatprep.subr.bf16.mxu0 0
      %1155 = vmatpush1.bf16.msra.mxu0 0
      %1156 = vmatprep.subr.bf16.mxu0 0
      %1157 = vmatpush1.bf16.msra.mxu0 0
      %1158 = vmatprep.subr.bf16.mxu0 0
      %1159 = vmatpush1.bf16.msra.mxu0 0
      %1160 = vmatprep.mubr.bf16.mxu0 0
      %1161 = vmatmul.mubr.bf16.gmra.mrb[0].mxu0 %v1105
      %v1162 = vpop.f32.mrb[0].mxu0
      %v1163 = vadd.f32 0.0, %v1162
      %v1164 = vpop.f32.mrb[0].mxu0
      %v1165 = vadd.f32 0.0, %v1164
      %v1166 = vpop.f32.mrb[0].mxu0
      %v1167 = vadd.f32 0.0, %v1166
      %v1168 = vpop.f32.mrb[0].mxu0
      %v1169 = vadd.f32 0.0, %v1168
      %1170 = vmatprep.mubr.bf16.mxu0 0
      %1171 = vmatmul.mubr.bf16.gmra.mrb[0].mxu0 %v1108
      %v1172 = vpop.f32.mrb[0].mxu0
      %v1173 = vadd.f32 0.0, %v1172
      %v1174 = vpop.f32.mrb[0].mxu0
      %v1175 = vadd.f32 0.0, %v1174
      %v1176 = vpop.f32.mrb[0].mxu0
      %v1177 = vadd.f32 0.0, %v1176
      %v1178 = vpop.f32.mrb[0].mxu0
      %v1179 = vadd.f32 0.0, %v1178
      %1180 = vmatprep.mubr.bf16.mxu0 0
      %1181 = vmatmul.mubr.bf16.gmra.mrb[0].mxu0 %v1111
      %v1182 = vpop.f32.mrb[0].mxu0
      %v1183 = vadd.f32 0.0, %v1182
      %v1184 = vpop.f32.mrb[0].mxu0
      %v1185 = vadd.f32 0.0, %v1184
      %v1186 = vpop.f32.mrb[0].mxu0
      %v1187 = vadd.f32 0.0, %v1186
      %v1188 = vpop.f32.mrb[0].mxu0
      %v1189 = vadd.f32 0.0, %v1188
      %1190 = vmatprep.mubr.bf16.mxu0 0
      %1191 = vmatmul.mubr.bf16.gmra.mrb[0].mxu0 %v1114
      %v1192 = vpop.f32.mrb[0].mxu0
      %v1193 = vadd.f32 0.0, %v1192
      %v1194 = vpop.f32.mrb[0].mxu0
      %v1195 = vadd.f32 0.0, %v1194
      %v1196 = vpop.f32.mrb[0].mxu0
      %v1197 = vadd.f32 0.0, %v1196
      %v1198 = vpop.f32.mrb[0].mxu0
      %v1199 = vadd.f32 0.0, %v1198
      %1200 = vmatprep.mubr.bf16.mxu0 0
      %1201 = vmatmul.mubr.bf16.gmra.mrb[0].mxu0 %v1117
      %v1202 = vpop.f32.mrb[0].mxu0
      %v1203 = vadd.f32 0.0, %v1202
      %v1204 = vpop.f32.mrb[0].mxu0
      %v1205 = vadd.f32 0.0, %v1204
      %v1206 = vpop.f32.mrb[0].mxu0
      %v1207 = vadd.f32 0.0, %v1206
      %v1208 = vpop.f32.mrb[0].mxu0
      %v1209 = vadd.f32 0.0, %v1208
      %1210 = vmatprep.mubr.bf16.mxu0 0
      %1211 = vmatmul.mubr.bf16.gmra.mrb[0].mxu0 %v1120
      %v1212 = vpop.f32.mrb[0].mxu0
      %v1213 = vadd.f32 0.0, %v1212
      %v1214 = vpop.f32.mrb[0].mxu0
      %v1215 = vadd.f32 0.0, %v1214
      %v1216 = vpop.f32.mrb[0].mxu0
      %v1217 = vadd.f32 0.0, %v1216
      %v1218 = vpop.f32.mrb[0].mxu0
      %v1219 = vadd.f32 0.0, %v1218
      %1220 = vmatprep.mubr.bf16.mxu0 0
      %1221 = vmatmul.mubr.bf16.gmra.mrb[0].mxu0 %v1123
      %v1222 = vpop.f32.mrb[0].mxu0
      %v1223 = vadd.f32 0.0, %v1222
      %v1224 = vpop.f32.mrb[0].mxu0
      %v1225 = vadd.f32 0.0, %v1224
      %v1226 = vpop.f32.mrb[0].mxu0
      %v1227 = vadd.f32 0.0, %v1226
      %v1228 = vpop.f32.mrb[0].mxu0
      %v1229 = vadd.f32 0.0, %v1228
      %1230 = vmatprep.mubr.bf16.mxu0 0
      %1231 = vmatmul.mubr.bf16.gmra.mrb[0].mxu0 %v1126
      %v1232 = vpop.f32.mrb[0].mxu0
      %v1233 = vadd.f32 0.0, %v1232
      %v1234 = vpop.f32.mrb[0].mxu0
      %v1235 = vadd.f32 0.0, %v1234
      %v1236 = vpop.f32.mrb[0].mxu0
      %v1237 = vadd.f32 0.0, %v1236
      %v1238 = vpop.f32.mrb[0].mxu0
      %v1239 = vadd.f32 0.0, %v1238
      %1240 = vdwg.mxu0
      %v1241 = vld [vmem:[%s7] sm:$0x3]
      %v1243 = vlaneseq
      %v1244 = vshrl.u32 %v1243, 7
      %v1245 = vsub.s32 0, %v1244
      %v1246 = vrot.slane %v1241, %v1245
      %v1247 = vlaneseq
      %v1248 = vshrl.u32 %v1247, 7
      %v1249 = vsub.s32 1, %v1248
      %v1250 = vrot.slane %v1241, %v1249
      %v1253 = vmul.f32 %v1163, %v1246
      %v1254 = vmul.f32 %v1165, %v1250
      %v1255 = vmul.f32 %v1167, %v1246
      %v1256 = vmul.f32 %v1169, %v1250
      %v1257 = vmul.f32 %v1173, %v1246
      %v1258 = vmul.f32 %v1175, %v1250
      %v1259 = vmul.f32 %v1177, %v1246
      %v1260 = vmul.f32 %v1179, %v1250
      %v1261 = vmul.f32 %v1183, %v1246
      %v1262 = vmul.f32 %v1185, %v1250
      %v1263 = vmul.f32 %v1187, %v1246
      %v1264 = vmul.f32 %v1189, %v1250
      %v1265 = vmul.f32 %v1193, %v1246
      %v1266 = vmul.f32 %v1195, %v1250
      %v1267 = vmul.f32 %v1197, %v1246
      %v1268 = vmul.f32 %v1199, %v1250
      %v1269 = vmul.f32 %v1253, 1.442695
      %v1270 = vpow.pop %v1269
      %v1271 = vmul.f32 %v1254, 1.442695
      %v1272 = vpow.pop %v1271
      %v1273 = vmul.f32 %v1255, 1.442695
      %v1274 = vpow.pop %v1273
      %v1275 = vmul.f32 %v1256, 1.442695
      %v1276 = vpow.pop %v1275
      %v1277 = vmul.f32 %v1257, 1.442695
      %v1278 = vpow.pop %v1277
      %v1279 = vmul.f32 %v1258, 1.442695
      %v1280 = vpow.pop %v1279
      %v1281 = vmul.f32 %v1259, 1.442695
      %v1282 = vpow.pop %v1281
      %v1283 = vmul.f32 %v1260, 1.442695
      %v1284 = vpow.pop %v1283
      %v1285 = vmul.f32 %v1261, 1.442695
      %v1286 = vpow.pop %v1285
      %v1287 = vmul.f32 %v1262, 1.442695
      %v1288 = vpow.pop %v1287
      %v1289 = vmul.f32 %v1263, 1.442695
      %v1290 = vpow.pop %v1289
      %v1291 = vmul.f32 %v1264, 1.442695
      %v1292 = vpow.pop %v1291
      %v1293 = vmul.f32 %v1265, 1.442695
      %v1294 = vpow.pop %v1293
      %v1295 = vmul.f32 %v1266, 1.442695
      %v1296 = vpow.pop %v1295
      %v1297 = vmul.f32 %v1267, 1.442695
      %v1298 = vpow.pop %v1297
      %v1299 = vmul.f32 %v1268, 1.442695
      %v1300 = vpow.pop %v1299
      %v1301 = vmul.f32 %v1203, %v813
      %v1302 = vmul.f32 %v1205, %v815
      %v1303 = vmul.f32 %v1207, %v817
      %v1304 = vmul.f32 %v1209, %v819
      %v1305 = vmul.f32 %v1213, %v823
      %v1306 = vmul.f32 %v1215, %v825
      %v1307 = vmul.f32 %v1217, %v827
      %v1308 = vmul.f32 %v1219, %v829
      %v1309 = vmul.f32 %v1223, %v833
      %v1310 = vmul.f32 %v1225, %v835
      %v1311 = vmul.f32 %v1227, %v837
      %v1312 = vmul.f32 %v1229, %v839
      %v1313 = vmul.f32 %v1233, %v843
      %v1314 = vmul.f32 %v1235, %v845
      %v1315 = vmul.f32 %v1237, %v847
      %v1316 = vmul.f32 %v1239, %v849
      %vm1317 = vcmp.ge.s32.totalorder %v488, 1
      %vm1318 = vcmp.ge.s32.totalorder %v489, 1
      %vm1319 = vcmp.ge.s32.totalorder %v490, 1
      %vm1320 = vcmp.ge.s32.totalorder %v491, 1
      %vm1321 = vcmp.ge.s32.totalorder %v492, 1
      %vm1322 = vcmp.ge.s32.totalorder %v493, 1
      %vm1323 = vcmp.ge.s32.totalorder %v494, 1
      %vm1324 = vcmp.ge.s32.totalorder %v495, 1
      %v1325 = vrot.slane %v1270, 7
      %v1326 = vrot.slane %v1272, 7
      %v1327 = vrot.slane %v1274, 7
      %v1328 = vrot.slane %v1276, 7
      %v1329 = vrot.slane %v1278, 7
      %v1330 = vrot.slane %v1280, 7
      %v1331 = vrot.slane %v1282, 7
      %v1332 = vrot.slane %v1284, 7
      %v1333 = vrot.slane %v1286, 7
      %v1334 = vrot.slane %v1288, 7
      %v1335 = vrot.slane %v1290, 7
      %v1336 = vrot.slane %v1292, 7
      %v1337 = vrot.slane %v1294, 7
      %v1338 = vrot.slane %v1296, 7
      %v1339 = vrot.slane %v1298, 7
      %v1340 = vrot.slane %v1300, 7
      %v1341 = vsel %vm509, %v1337, %v1339
      %v1342 = vsel %vm509, %v1338, %v1340
      %v1343 = vsel %vm509, %v1335, %v1337
      %v1344 = vsel %vm509, %v1336, %v1338
      %v1345 = vsel %vm509, %v1333, %v1335
      %v1346 = vsel %vm509, %v1334, %v1336
      %v1347 = vsel %vm509, %v1331, %v1333
      %v1348 = vsel %vm509, %v1332, %v1334
      %v1349 = vsel %vm509, %v1329, %v1331
      %v1350 = vsel %vm509, %v1330, %v1332
      %v1351 = vsel %vm509, %v1327, %v1329
      %v1352 = vsel %vm509, %v1328, %v1330
      %v1353 = vsel %vm509, %v1325, %v1327
      %v1354 = vsel %vm509, %v1326, %v1328
      %v1355 = vsel %vm509, %v1339, %v1325
      %v1356 = vsel %vm509, %v1340, %v1326
      %v1357 = vsel %vm1317, %v1355, 1.0
      %v1358 = vsel %vm1317, %v1356, 1.0
      %v1359 = vsel %vm1318, %v1353, 1.0
      %v1360 = vsel %vm1318, %v1354, 1.0
      %v1361 = vsel %vm1319, %v1351, 1.0
      %v1362 = vsel %vm1319, %v1352, 1.0
      %v1363 = vsel %vm1320, %v1349, 1.0
      %v1364 = vsel %vm1320, %v1350, 1.0
      %v1365 = vsel %vm1321, %v1347, 1.0
      %v1366 = vsel %vm1321, %v1348, 1.0
      %v1367 = vsel %vm1322, %v1345, 1.0
      %v1368 = vsel %vm1322, %v1346, 1.0
      %v1369 = vsel %vm1323, %v1343, 1.0
      %v1370 = vsel %vm1323, %v1344, 1.0
      %v1371 = vsel %vm1324, %v1341, 1.0
      %v1372 = vsel %vm1324, %v1342, 1.0
      %v1373 = vrot.slane %v1301, 7
      %v1374 = vrot.slane %v1302, 7
      %v1375 = vrot.slane %v1303, 7
      %v1376 = vrot.slane %v1304, 7
      %v1377 = vrot.slane %v1305, 7
      %v1378 = vrot.slane %v1306, 7
      %v1379 = vrot.slane %v1307, 7
      %v1380 = vrot.slane %v1308, 7
      %v1381 = vrot.slane %v1309, 7
      %v1382 = vrot.slane %v1310, 7
      %v1383 = vrot.slane %v1311, 7
      %v1384 = vrot.slane %v1312, 7
      %v1385 = vrot.slane %v1313, 7
      %v1386 = vrot.slane %v1314, 7
      %v1387 = vrot.slane %v1315, 7
      %v1388 = vrot.slane %v1316, 7
      %v1389 = vsel %vm509, %v1385, %v1387
      %v1390 = vsel %vm509, %v1386, %v1388
      %v1391 = vsel %vm509, %v1383, %v1385
      %v1392 = vsel %vm509, %v1384, %v1386
      %v1393 = vsel %vm509, %v1381, %v1383
      %v1394 = vsel %vm509, %v1382, %v1384
      %v1395 = vsel %vm509, %v1379, %v1381
      %v1396 = vsel %vm509, %v1380, %v1382
      %v1397 = vsel %vm509, %v1377, %v1379
      %v1398 = vsel %vm509, %v1378, %v1380
      %v1399 = vsel %vm509, %v1375, %v1377
      %v1400 = vsel %vm509, %v1376, %v1378
      %v1401 = vsel %vm509, %v1373, %v1375
      %v1402 = vsel %vm509, %v1374, %v1376
      %v1403 = vsel %vm509, %v1387, %v1373
      %v1404 = vsel %vm509, %v1388, %v1374
      %v1405 = vsel %vm1317, %v1403, 0.0
      %v1406 = vsel %vm1317, %v1404, 0.0
      %v1407 = vsel %vm1318, %v1401, 0.0
      %v1408 = vsel %vm1318, %v1402, 0.0
      %v1409 = vsel %vm1319, %v1399, 0.0
      %v1410 = vsel %vm1319, %v1400, 0.0
      %v1411 = vsel %vm1320, %v1397, 0.0
      %v1412 = vsel %vm1320, %v1398, 0.0
      %v1413 = vsel %vm1321, %v1395, 0.0
      %v1414 = vsel %vm1321, %v1396, 0.0
      %v1415 = vsel %vm1322, %v1393, 0.0
      %v1416 = vsel %vm1322, %v1394, 0.0
      %v1417 = vsel %vm1323, %v1391, 0.0
      %v1418 = vsel %vm1323, %v1392, 0.0
      %v1419 = vsel %vm1324, %v1389, 0.0
      %v1420 = vsel %vm1324, %v1390, 0.0
      %v1421 = vmul.f32 %v1270, %v1405
      %v1422 = vmul.f32 %v1272, %v1406
      %v1423 = vmul.f32 %v1274, %v1407
      %v1424 = vmul.f32 %v1276, %v1408
      %v1425 = vmul.f32 %v1278, %v1409
      %v1426 = vmul.f32 %v1280, %v1410
      %v1427 = vmul.f32 %v1282, %v1411
      %v1428 = vmul.f32 %v1284, %v1412
      %v1429 = vmul.f32 %v1286, %v1413
      %v1430 = vmul.f32 %v1288, %v1414
      %v1431 = vmul.f32 %v1290, %v1415
      %v1432 = vmul.f32 %v1292, %v1416
      %v1433 = vmul.f32 %v1294, %v1417
      %v1434 = vmul.f32 %v1296, %v1418
      %v1435 = vmul.f32 %v1298, %v1419
      %v1436 = vmul.f32 %v1300, %v1420
      %v1437 = vadd.f32 %v1421, %v1301
      %v1438 = vadd.f32 %v1422, %v1302
      %v1439 = vadd.f32 %v1423, %v1303
      %v1440 = vadd.f32 %v1424, %v1304
      %v1441 = vadd.f32 %v1425, %v1305
      %v1442 = vadd.f32 %v1426, %v1306
      %v1443 = vadd.f32 %v1427, %v1307
      %v1444 = vadd.f32 %v1428, %v1308
      %v1445 = vadd.f32 %v1429, %v1309
      %v1446 = vadd.f32 %v1430, %v1310
      %v1447 = vadd.f32 %v1431, %v1311
      %v1448 = vadd.f32 %v1432, %v1312
      %v1449 = vadd.f32 %v1433, %v1313
      %v1450 = vadd.f32 %v1434, %v1314
      %v1451 = vadd.f32 %v1435, %v1315
      %v1452 = vadd.f32 %v1436, %v1316
      %v1453 = vmul.f32 %v1270, %v1357
      %v1454 = vmul.f32 %v1272, %v1358
      %v1455 = vmul.f32 %v1274, %v1359
      %v1456 = vmul.f32 %v1276, %v1360
      %v1457 = vmul.f32 %v1278, %v1361
      %v1458 = vmul.f32 %v1280, %v1362
      %v1459 = vmul.f32 %v1282, %v1363
      %v1460 = vmul.f32 %v1284, %v1364
      %v1461 = vmul.f32 %v1286, %v1365
      %v1462 = vmul.f32 %v1288, %v1366
      %v1463 = vmul.f32 %v1290, %v1367
      %v1464 = vmul.f32 %v1292, %v1368
      %v1465 = vmul.f32 %v1294, %v1369
      %v1466 = vmul.f32 %v1296, %v1370
      %v1467 = vmul.f32 %v1298, %v1371
      %v1468 = vmul.f32 %v1300, %v1372
      %vm1469 = vcmp.ge.s32.totalorder %v488, 2
      %vm1470 = vcmp.ge.s32.totalorder %v489, 2
      %vm1471 = vcmp.ge.s32.totalorder %v490, 2
      %vm1472 = vcmp.ge.s32.totalorder %v491, 2
      %vm1473 = vcmp.ge.s32.totalorder %v492, 2
      %vm1474 = vcmp.ge.s32.totalorder %v493, 2
      %vm1475 = vcmp.ge.s32.totalorder %v494, 2
      %vm1476 = vcmp.ge.s32.totalorder %v495, 2
      %v1477 = vrot.slane %v1453, 6
      %v1478 = vrot.slane %v1454, 6
      %v1479 = vrot.slane %v1455, 6
      %v1480 = vrot.slane %v1456, 6
      %v1481 = vrot.slane %v1457, 6
      %v1482 = vrot.slane %v1458, 6
      %v1483 = vrot.slane %v1459, 6
      %v1484 = vrot.slane %v1460, 6
      %v1485 = vrot.slane %v1461, 6
      %v1486 = vrot.slane %v1462, 6
      %v1487 = vrot.slane %v1463, 6
      %v1488 = vrot.slane %v1464, 6
      %v1489 = vrot.slane %v1465, 6
      %v1490 = vrot.slane %v1466, 6
      %v1491 = vrot.slane %v1467, 6
      %v1492 = vrot.slane %v1468, 6
      %v1493 = vsel %vm562, %v1489, %v1491
      %v1494 = vsel %vm562, %v1490, %v1492
      %v1495 = vsel %vm562, %v1487, %v1489
      %v1496 = vsel %vm562, %v1488, %v1490
      %v1497 = vsel %vm562, %v1485, %v1487
      %v1498 = vsel %vm562, %v1486, %v1488
      %v1499 = vsel %vm562, %v1483, %v1485
      %v1500 = vsel %vm562, %v1484, %v1486
      %v1501 = vsel %vm562, %v1481, %v1483
      %v1502 = vsel %vm562, %v1482, %v1484
      %v1503 = vsel %vm562, %v1479, %v1481
      %v1504 = vsel %vm562, %v1480, %v1482
      %v1505 = vsel %vm562, %v1477, %v1479
      %v1506 = vsel %vm562, %v1478, %v1480
      %v1507 = vsel %vm562, %v1491, %v1477
      %v1508 = vsel %vm562, %v1492, %v1478
      %v1509 = vsel %vm1469, %v1507, 1.0
      %v1510 = vsel %vm1469, %v1508, 1.0
      %v1511 = vsel %vm1470, %v1505, 1.0
      %v1512 = vsel %vm1470, %v1506, 1.0
      %v1513 = vsel %vm1471, %v1503, 1.0
      %v1514 = vsel %vm1471, %v1504, 1.0
      %v1515 = vsel %vm1472, %v1501, 1.0
      %v1516 = vsel %vm1472, %v1502, 1.0
      %v1517 = vsel %vm1473, %v1499, 1.0
      %v1518 = vsel %vm1473, %v1500, 1.0
      %v1519 = vsel %vm1474, %v1497, 1.0
      %v1520 = vsel %vm1474, %v1498, 1.0
      %v1521 = vsel %vm1475, %v1495, 1.0
      %v1522 = vsel %vm1475, %v1496, 1.0
      %v1523 = vsel %vm1476, %v1493, 1.0
      %v1524 = vsel %vm1476, %v1494, 1.0
      %v1525 = vrot.slane %v1437, 6
      %v1526 = vrot.slane %v1438, 6
      %v1527 = vrot.slane %v1439, 6
      %v1528 = vrot.slane %v1440, 6
      %v1529 = vrot.slane %v1441, 6
      %v1530 = vrot.slane %v1442, 6
      %v1531 = vrot.slane %v1443, 6
      %v1532 = vrot.slane %v1444, 6
      %v1533 = vrot.slane %v1445, 6
      %v1534 = vrot.slane %v1446, 6
      %v1535 = vrot.slane %v1447, 6
      %v1536 = vrot.slane %v1448, 6
      %v1537 = vrot.slane %v1449, 6
      %v1538 = vrot.slane %v1450, 6
      %v1539 = vrot.slane %v1451, 6
      %v1540 = vrot.slane %v1452, 6
      %v1541 = vsel %vm562, %v1537, %v1539
      %v1542 = vsel %vm562, %v1538, %v1540
      %v1543 = vsel %vm562, %v1535, %v1537
      %v1544 = vsel %vm562, %v1536, %v1538
      %v1545 = vsel %vm562, %v1533, %v1535
      %v1546 = vsel %vm562, %v1534, %v1536
      %v1547 = vsel %vm562, %v1531, %v1533
      %v1548 = vsel %vm562, %v1532, %v1534
      %v1549 = vsel %vm562, %v1529, %v1531
      %v1550 = vsel %vm562, %v1530, %v1532
      %v1551 = vsel %vm562, %v1527, %v1529
      %v1552 = vsel %vm562, %v1528, %v1530
      %v1553 = vsel %vm562, %v1525, %v1527
      %v1554 = vsel %vm562, %v1526, %v1528
      %v1555 = vsel %vm562, %v1539, %v1525
      %v1556 = vsel %vm562, %v1540, %v1526
      %v1557 = vsel %vm1469, %v1555, 0.0
      %v1558 = vsel %vm1469, %v1556, 0.0
      %v1559 = vsel %vm1470, %v1553, 0.0
      %v1560 = vsel %vm1470, %v1554, 0.0
      %v1561 = vsel %vm1471, %v1551, 0.0
      %v1562 = vsel %vm1471, %v1552, 0.0
      %v1563 = vsel %vm1472, %v1549, 0.0
      %v1564 = vsel %vm1472, %v1550, 0.0
      %v1565 = vsel %vm1473, %v1547, 0.0
      %v1566 = vsel %vm1473, %v1548, 0.0
      %v1567 = vsel %vm1474, %v1545, 0.0
      %v1568 = vsel %vm1474, %v1546, 0.0
      %v1569 = vsel %vm1475, %v1543, 0.0
      %v1570 = vsel %vm1475, %v1544, 0.0
      %v1571 = vsel %vm1476, %v1541, 0.0
      %v1572 = vsel %vm1476, %v1542, 0.0
      %v1573 = vmul.f32 %v1453, %v1557
      %v1574 = vmul.f32 %v1454, %v1558
      %v1575 = vmul.f32 %v1455, %v1559
      %v1576 = vmul.f32 %v1456, %v1560
      %v1577 = vmul.f32 %v1457, %v1561
      %v1578 = vmul.f32 %v1458, %v1562
      %v1579 = vmul.f32 %v1459, %v1563
      %v1580 = vmul.f32 %v1460, %v1564
      %v1581 = vmul.f32 %v1461, %v1565
      %v1582 = vmul.f32 %v1462, %v1566
      %v1583 = vmul.f32 %v1463, %v1567
      %v1584 = vmul.f32 %v1464, %v1568
      %v1585 = vmul.f32 %v1465, %v1569
      %v1586 = vmul.f32 %v1466, %v1570
      %v1587 = vmul.f32 %v1467, %v1571
      %v1588 = vmul.f32 %v1468, %v1572
      %v1589 = vadd.f32 %v1573, %v1437
      %v1590 = vadd.f32 %v1574, %v1438
      %v1591 = vadd.f32 %v1575, %v1439
      %v1592 = vadd.f32 %v1576, %v1440
      %v1593 = vadd.f32 %v1577, %v1441
      %v1594 = vadd.f32 %v1578, %v1442
      %v1595 = vadd.f32 %v1579, %v1443
      %v1596 = vadd.f32 %v1580, %v1444
      %v1597 = vadd.f32 %v1581, %v1445
      %v1598 = vadd.f32 %v1582, %v1446
      %v1599 = vadd.f32 %v1583, %v1447
      %v1600 = vadd.f32 %v1584, %v1448
      %v1601 = vadd.f32 %v1585, %v1449
      %v1602 = vadd.f32 %v1586, %v1450
      %v1603 = vadd.f32 %v1587, %v1451
      %v1604 = vadd.f32 %v1588, %v1452
      %v1605 = vmul.f32 %v1453, %v1509
      %v1606 = vmul.f32 %v1454, %v1510
      %v1607 = vmul.f32 %v1455, %v1511
      %v1608 = vmul.f32 %v1456, %v1512
      %v1609 = vmul.f32 %v1457, %v1513
      %v1610 = vmul.f32 %v1458, %v1514
      %v1611 = vmul.f32 %v1459, %v1515
      %v1612 = vmul.f32 %v1460, %v1516
      %v1613 = vmul.f32 %v1461, %v1517
      %v1614 = vmul.f32 %v1462, %v1518
      %v1615 = vmul.f32 %v1463, %v1519
      %v1616 = vmul.f32 %v1464, %v1520
      %v1617 = vmul.f32 %v1465, %v1521
      %v1618 = vmul.f32 %v1466, %v1522
      %v1619 = vmul.f32 %v1467, %v1523
      %v1620 = vmul.f32 %v1468, %v1524
      %vm1621 = vcmp.ge.s32.totalorder %v488, 4
      %vm1622 = vcmp.ge.s32.totalorder %v489, 4
      %vm1623 = vcmp.ge.s32.totalorder %v490, 4
      %vm1624 = vcmp.ge.s32.totalorder %v491, 4
      %vm1625 = vcmp.ge.s32.totalorder %v492, 4
      %vm1626 = vcmp.ge.s32.totalorder %v493, 4
      %vm1627 = vcmp.ge.s32.totalorder %v494, 4
      %vm1628 = vcmp.ge.s32.totalorder %v495, 4
      %v1629 = vrot.slane %v1605, 4
      %v1630 = vrot.slane %v1606, 4
      %v1631 = vrot.slane %v1607, 4
      %v1632 = vrot.slane %v1608, 4
      %v1633 = vrot.slane %v1609, 4
      %v1634 = vrot.slane %v1610, 4
      %v1635 = vrot.slane %v1611, 4
      %v1636 = vrot.slane %v1612, 4
      %v1637 = vrot.slane %v1613, 4
      %v1638 = vrot.slane %v1614, 4
      %v1639 = vrot.slane %v1615, 4
      %v1640 = vrot.slane %v1616, 4
      %v1641 = vrot.slane %v1617, 4
      %v1642 = vrot.slane %v1618, 4
      %v1643 = vrot.slane %v1619, 4
      %v1644 = vrot.slane %v1620, 4
      %vm1645 = vcmp.lt.s32.totalorder %v488, 4
      %v1646 = vsel %vm1645, %v1641, %v1643
      %v1647 = vsel %vm1645, %v1642, %v1644
      %v1648 = vsel %vm1645, %v1639, %v1641
      %v1649 = vsel %vm1645, %v1640, %v1642
      %v1650 = vsel %vm1645, %v1637, %v1639
      %v1651 = vsel %vm1645, %v1638, %v1640
      %v1652 = vsel %vm1645, %v1635, %v1637
      %v1653 = vsel %vm1645, %v1636, %v1638
      %v1654 = vsel %vm1645, %v1633, %v1635
      %v1655 = vsel %vm1645, %v1634, %v1636
      %v1656 = vsel %vm1645, %v1631, %v1633
      %v1657 = vsel %vm1645, %v1632, %v1634
      %v1658 = vsel %vm1645, %v1629, %v1631
      %v1659 = vsel %vm1645, %v1630, %v1632
      %v1660 = vsel %vm1645, %v1643, %v1629
      %v1661 = vsel %vm1645, %v1644, %v1630
      %v1662 = vsel %vm1621, %v1660, 1.0
      %v1663 = vsel %vm1621, %v1661, 1.0
      %v1664 = vsel %vm1622, %v1658, 1.0
      %v1665 = vsel %vm1622, %v1659, 1.0
      %v1666 = vsel %vm1623, %v1656, 1.0
      %v1667 = vsel %vm1623, %v1657, 1.0
      %v1668 = vsel %vm1624, %v1654, 1.0
      %v1669 = vsel %vm1624, %v1655, 1.0
      %v1670 = vsel %vm1625, %v1652, 1.0
      %v1671 = vsel %vm1625, %v1653, 1.0
      %v1672 = vsel %vm1626, %v1650, 1.0
      %v1673 = vsel %vm1626, %v1651, 1.0
      %v1674 = vsel %vm1627, %v1648, 1.0
      %v1675 = vsel %vm1627, %v1649, 1.0
      %v1676 = vsel %vm1628, %v1646, 1.0
      %v1677 = vsel %vm1628, %v1647, 1.0
      %v1678 = vrot.slane %v1589, 4
      %v1679 = vrot.slane %v1590, 4
      %v1680 = vrot.slane %v1591, 4
      %v1681 = vrot.slane %v1592, 4
      %v1682 = vrot.slane %v1593, 4
      %v1683 = vrot.slane %v1594, 4
      %v1684 = vrot.slane %v1595, 4
      %v1685 = vrot.slane %v1596, 4
      %v1686 = vrot.slane %v1597, 4
      %v1687 = vrot.slane %v1598, 4
      %v1688 = vrot.slane %v1599, 4
      %v1689 = vrot.slane %v1600, 4
      %v1690 = vrot.slane %v1601, 4
      %v1691 = vrot.slane %v1602, 4
      %v1692 = vrot.slane %v1603, 4
      %v1693 = vrot.slane %v1604, 4
      %v1694 = vsel %vm1645, %v1690, %v1692
      %v1695 = vsel %vm1645, %v1691, %v1693
      %v1696 = vsel %vm1645, %v1688, %v1690
      %v1697 = vsel %vm1645, %v1689, %v1691
      %v1698 = vsel %vm1645, %v1686, %v1688
      %v1699 = vsel %vm1645, %v1687, %v1689
      %v1700 = vsel %vm1645, %v1684, %v1686
      %v1701 = vsel %vm1645, %v1685, %v1687
      %v1702 = vsel %vm1645, %v1682, %v1684
      %v1703 = vsel %vm1645, %v1683, %v1685
      %v1704 = vsel %vm1645, %v1680, %v1682
      %v1705 = vsel %vm1645, %v1681, %v1683
      %v1706 = vsel %vm1645, %v1678, %v1680
      %v1707 = vsel %vm1645, %v1679, %v1681
      %v1708 = vsel %vm1645, %v1692, %v1678
      %v1709 = vsel %vm1645, %v1693, %v1679
      %v1710 = vsel %vm1621, %v1708, 0.0
      %v1711 = vsel %vm1621, %v1709, 0.0
      %v1712 = vsel %vm1622, %v1706, 0.0
      %v1713 = vsel %vm1622, %v1707, 0.0
      %v1714 = vsel %vm1623, %v1704, 0.0
      %v1715 = vsel %vm1623, %v1705, 0.0
      %v1716 = vsel %vm1624, %v1702, 0.0
      %v1717 = vsel %vm1624, %v1703, 0.0
      %v1718 = vsel %vm1625, %v1700, 0.0
      %v1719 = vsel %vm1625, %v1701, 0.0
      %v1720 = vsel %vm1626, %v1698, 0.0
      %v1721 = vsel %vm1626, %v1699, 0.0
      %v1722 = vsel %vm1627, %v1696, 0.0
      %v1723 = vsel %vm1627, %v1697, 0.0
      %v1724 = vsel %vm1628, %v1694, 0.0
      %v1725 = vsel %vm1628, %v1695, 0.0
      %v1726 = vmul.f32 %v1605, %v1710
      %v1727 = vmul.f32 %v1606, %v1711
      %v1728 = vmul.f32 %v1607, %v1712
      %v1729 = vmul.f32 %v1608, %v1713
      %v1730 = vmul.f32 %v1609, %v1714
      %v1731 = vmul.f32 %v1610, %v1715
      %v1732 = vmul.f32 %v1611, %v1716
      %v1733 = vmul.f32 %v1612, %v1717
      %v1734 = vmul.f32 %v1613, %v1718
      %v1735 = vmul.f32 %v1614, %v1719
      %v1736 = vmul.f32 %v1615, %v1720
      %v1737 = vmul.f32 %v1616, %v1721
      %v1738 = vmul.f32 %v1617, %v1722
      %v1739 = vmul.f32 %v1618, %v1723
      %v1740 = vmul.f32 %v1619, %v1724
      %v1741 = vmul.f32 %v1620, %v1725
      %v1742 = vadd.f32 %v1726, %v1589
      %v1743 = vadd.f32 %v1727, %v1590
      %v1744 = vadd.f32 %v1728, %v1591
      %v1745 = vadd.f32 %v1729, %v1592
      %v1746 = vadd.f32 %v1730, %v1593
      %v1747 = vadd.f32 %v1731, %v1594
      %v1748 = vadd.f32 %v1732, %v1595
      %v1749 = vadd.f32 %v1733, %v1596
      %v1750 = vadd.f32 %v1734, %v1597
      %v1751 = vadd.f32 %v1735, %v1598
      %v1752 = vadd.f32 %v1736, %v1599
      %v1753 = vadd.f32 %v1737, %v1600
      %v1754 = vadd.f32 %v1738, %v1601
      %v1755 = vadd.f32 %v1739, %v1602
      %v1756 = vadd.f32 %v1740, %v1603
      %v1757 = vadd.f32 %v1741, %v1604
      %v1758 = vmul.f32 %v1605, %v1662
      %v1759 = vmul.f32 %v1606, %v1663
      %v1760 = vmul.f32 %v1607, %v1664
      %v1761 = vmul.f32 %v1608, %v1665
      %v1762 = vmul.f32 %v1609, %v1666
      %v1763 = vmul.f32 %v1610, %v1667
      %v1764 = vmul.f32 %v1611, %v1668
      %v1765 = vmul.f32 %v1612, %v1669
      %v1766 = vmul.f32 %v1613, %v1670
      %v1767 = vmul.f32 %v1614, %v1671
      %v1768 = vmul.f32 %v1615, %v1672
      %v1769 = vmul.f32 %v1616, %v1673
      %v1770 = vmul.f32 %v1617, %v1674
      %v1771 = vmul.f32 %v1618, %v1675
      %v1772 = vmul.f32 %v1619, %v1676
      %v1773 = vmul.f32 %v1620, %v1677
      %vm1774 = vcmp.ge.s32.totalorder %v488, 8
      %vm1775 = vcmp.ge.s32.totalorder %v489, 8
      %vm1776 = vcmp.ge.s32.totalorder %v490, 8
      %vm1777 = vcmp.ge.s32.totalorder %v491, 8
      %vm1778 = vcmp.ge.s32.totalorder %v492, 8
      %vm1779 = vcmp.ge.s32.totalorder %v493, 8
      %vm1780 = vcmp.ge.s32.totalorder %v494, 8
      %vm1781 = vcmp.ge.s32.totalorder %v495, 8
      %v1782 = vsel %vm1774, %v1772, 1.0
      %v1783 = vsel %vm1774, %v1773, 1.0
      %v1784 = vsel %vm1775, %v1758, 1.0
      %v1785 = vsel %vm1775, %v1759, 1.0
      %v1786 = vsel %vm1776, %v1760, 1.0
      %v1787 = vsel %vm1776, %v1761, 1.0
      %v1788 = vsel %vm1777, %v1762, 1.0
      %v1789 = vsel %vm1777, %v1763, 1.0
      %v1790 = vsel %vm1778, %v1764, 1.0
      %v1791 = vsel %vm1778, %v1765, 1.0
      %v1792 = vsel %vm1779, %v1766, 1.0
      %v1793 = vsel %vm1779, %v1767, 1.0
      %v1794 = vsel %vm1780, %v1768, 1.0
      %v1795 = vsel %vm1780, %v1769, 1.0
      %v1796 = vsel %vm1781, %v1770, 1.0
      %v1797 = vsel %vm1781, %v1771, 1.0
      %v1798 = vsel %vm1774, %v1756, 0.0
      %v1799 = vsel %vm1774, %v1757, 0.0
      %v1800 = vsel %vm1775, %v1742, 0.0
      %v1801 = vsel %vm1775, %v1743, 0.0
      %v1802 = vsel %vm1776, %v1744, 0.0
      %v1803 = vsel %vm1776, %v1745, 0.0
      %v1804 = vsel %vm1777, %v1746, 0.0
      %v1805 = vsel %vm1777, %v1747, 0.0
      %v1806 = vsel %vm1778, %v1748, 0.0
      %v1807 = vsel %vm1778, %v1749, 0.0
      %v1808 = vsel %vm1779, %v1750, 0.0
      %v1809 = vsel %vm1779, %v1751, 0.0
      %v1810 = vsel %vm1780, %v1752, 0.0
      %v1811 = vsel %vm1780, %v1753, 0.0
      %v1812 = vsel %vm1781, %v1754, 0.0
      %v1813 = vsel %vm1781, %v1755, 0.0
      %v1814 = vmul.f32 %v1758, %v1798
      %v1815 = vmul.f32 %v1759, %v1799
      %v1816 = vmul.f32 %v1760, %v1800
      %v1817 = vmul.f32 %v1761, %v1801
      %v1818 = vmul.f32 %v1762, %v1802
      %v1819 = vmul.f32 %v1763, %v1803
      %v1820 = vmul.f32 %v1764, %v1804
      %v1821 = vmul.f32 %v1765, %v1805
      %v1822 = vmul.f32 %v1766, %v1806
      %v1823 = vmul.f32 %v1767, %v1807
      %v1824 = vmul.f32 %v1768, %v1808
      %v1825 = vmul.f32 %v1769, %v1809
      %v1826 = vmul.f32 %v1770, %v1810
      %v1827 = vmul.f32 %v1771, %v1811
      %v1828 = vmul.f32 %v1772, %v1812
      %v1829 = vmul.f32 %v1773, %v1813
      %v1830 = vadd.f32 %v1814, %v1742
      %v1831 = vadd.f32 %v1815, %v1743
      %v1832 = vadd.f32 %v1816, %v1744
      %v1833 = vadd.f32 %v1817, %v1745
      %v1834 = vadd.f32 %v1818, %v1746
      %v1835 = vadd.f32 %v1819, %v1747
      %v1836 = vadd.f32 %v1820, %v1748
      %v1837 = vadd.f32 %v1821, %v1749
      %v1838 = vadd.f32 %v1822, %v1750
      %v1839 = vadd.f32 %v1823, %v1751
      %v1840 = vadd.f32 %v1824, %v1752
      %v1841 = vadd.f32 %v1825, %v1753
      %v1842 = vadd.f32 %v1826, %v1754
      %v1843 = vadd.f32 %v1827, %v1755
      %v1844 = vadd.f32 %v1828, %v1756
      %v1845 = vadd.f32 %v1829, %v1757
      %v1846 = vmul.f32 %v1758, %v1782
      %v1847 = vmul.f32 %v1759, %v1783
      %v1848 = vmul.f32 %v1760, %v1784
      %v1849 = vmul.f32 %v1761, %v1785
      %v1850 = vmul.f32 %v1762, %v1786
      %v1851 = vmul.f32 %v1763, %v1787
      %v1852 = vmul.f32 %v1764, %v1788
      %v1853 = vmul.f32 %v1765, %v1789
      %v1854 = vmul.f32 %v1766, %v1790
      %v1855 = vmul.f32 %v1767, %v1791
      %v1856 = vmul.f32 %v1768, %v1792
      %v1857 = vmul.f32 %v1769, %v1793
      %v1858 = vmul.f32 %v1770, %v1794
      %v1859 = vmul.f32 %v1771, %v1795
      %v1860 = vmul.f32 %v1772, %v1796
      %v1861 = vmul.f32 %v1773, %v1797
      %vm1862 = vcmp.ge.s32.totalorder %v488, 16
      %vm1863 = vcmp.ge.s32.totalorder %v489, 16
      %vm1864 = vcmp.ge.s32.totalorder %v490, 16
      %vm1865 = vcmp.ge.s32.totalorder %v491, 16
      %vm1866 = vcmp.ge.s32.totalorder %v492, 16
      %vm1867 = vcmp.ge.s32.totalorder %v493, 16
      %vm1868 = vcmp.ge.s32.totalorder %v494, 16
      %vm1869 = vcmp.ge.s32.totalorder %v495, 16
      %v1870 = vsel %vm1862, %v1858, 1.0
      %v1871 = vsel %vm1862, %v1859, 1.0
      %v1872 = vsel %vm1863, %v1860, 1.0
      %v1873 = vsel %vm1863, %v1861, 1.0
      %v1874 = vsel %vm1864, %v1846, 1.0
      %v1875 = vsel %vm1864, %v1847, 1.0
      %v1876 = vsel %vm1865, %v1848, 1.0
      %v1877 = vsel %vm1865, %v1849, 1.0
      %v1878 = vsel %vm1866, %v1850, 1.0
      %v1879 = vsel %vm1866, %v1851, 1.0
      %v1880 = vsel %vm1867, %v1852, 1.0
      %v1881 = vsel %vm1867, %v1853, 1.0
      %v1882 = vsel %vm1868, %v1854, 1.0
      %v1883 = vsel %vm1868, %v1855, 1.0
      %v1884 = vsel %vm1869, %v1856, 1.0
      %v1885 = vsel %vm1869, %v1857, 1.0
      %v1886 = vsel %vm1862, %v1842, 0.0
      %v1887 = vsel %vm1862, %v1843, 0.0
      %v1888 = vsel %vm1863, %v1844, 0.0
      %v1889 = vsel %vm1863, %v1845, 0.0
      %v1890 = vsel %vm1864, %v1830, 0.0
      %v1891 = vsel %vm1864, %v1831, 0.0
      %v1892 = vsel %vm1865, %v1832, 0.0
      %v1893 = vsel %vm1865, %v1833, 0.0
      %v1894 = vsel %vm1866, %v1834, 0.0
      %v1895 = vsel %vm1866, %v1835, 0.0
      %v1896 = vsel %vm1867, %v1836, 0.0
      %v1897 = vsel %vm1867, %v1837, 0.0
      %v1898 = vsel %vm1868, %v1838, 0.0
      %v1899 = vsel %vm1868, %v1839, 0.0
      %v1900 = vsel %vm1869, %v1840, 0.0
      %v1901 = vsel %vm1869, %v1841, 0.0
      %v1902 = vmul.f32 %v1846, %v1886
      %v1903 = vmul.f32 %v1847, %v1887
      %v1904 = vmul.f32 %v1848, %v1888
      %v1905 = vmul.f32 %v1849, %v1889
      %v1906 = vmul.f32 %v1850, %v1890
      %v1907 = vmul.f32 %v1851, %v1891
      %v1908 = vmul.f32 %v1852, %v1892
      %v1909 = vmul.f32 %v1853, %v1893
      %v1910 = vmul.f32 %v1854, %v1894
      %v1911 = vmul.f32 %v1855, %v1895
      %v1912 = vmul.f32 %v1856, %v1896
      %v1913 = vmul.f32 %v1857, %v1897
      %v1914 = vmul.f32 %v1858, %v1898
      %v1915 = vmul.f32 %v1859, %v1899
      %v1916 = vmul.f32 %v1860, %v1900
      %v1917 = vmul.f32 %v1861, %v1901
      %v1918 = vadd.f32 %v1902, %v1830
      %v1919 = vadd.f32 %v1903, %v1831
      %v1920 = vadd.f32 %v1904, %v1832
      %v1921 = vadd.f32 %v1905, %v1833
      %v1922 = vadd.f32 %v1906, %v1834
      %v1923 = vadd.f32 %v1907, %v1835
      %v1924 = vadd.f32 %v1908, %v1836
      %v1925 = vadd.f32 %v1909, %v1837
      %v1926 = vadd.f32 %v1910, %v1838
      %v1927 = vadd.f32 %v1911, %v1839
      %v1928 = vadd.f32 %v1912, %v1840
      %v1929 = vadd.f32 %v1913, %v1841
      %v1930 = vadd.f32 %v1914, %v1842
      %v1931 = vadd.f32 %v1915, %v1843
      %v1932 = vadd.f32 %v1916, %v1844
      %v1933 = vadd.f32 %v1917, %v1845
      %v1934 = vmul.f32 %v1846, %v1870
      %v1935 = vmul.f32 %v1847, %v1871
      %v1936 = vmul.f32 %v1848, %v1872
      %v1937 = vmul.f32 %v1849, %v1873
      %v1938 = vmul.f32 %v1850, %v1874
      %v1939 = vmul.f32 %v1851, %v1875
      %v1940 = vmul.f32 %v1852, %v1876
      %v1941 = vmul.f32 %v1853, %v1877
      %v1942 = vmul.f32 %v1854, %v1878
      %v1943 = vmul.f32 %v1855, %v1879
      %v1944 = vmul.f32 %v1856, %v1880
      %v1945 = vmul.f32 %v1857, %v1881
      %v1946 = vmul.f32 %v1858, %v1882
      %v1947 = vmul.f32 %v1859, %v1883
      %v1948 = vmul.f32 %v1860, %v1884
      %v1949 = vmul.f32 %v1861, %v1885
      %vm1950 = vcmp.ge.s32.totalorder %v488, 32
      %vm1951 = vcmp.ge.s32.totalorder %v489, 32
      %vm1952 = vcmp.ge.s32.totalorder %v490, 32
      %vm1953 = vcmp.ge.s32.totalorder %v491, 32
      %vm1954 = vcmp.ge.s32.totalorder %v492, 32
      %vm1955 = vcmp.ge.s32.totalorder %v493, 32
      %vm1956 = vcmp.ge.s32.totalorder %v494, 32
      %vm1957 = vcmp.ge.s32.totalorder %v495, 32
      %v1958 = vsel %vm1950, %v1926, 0.0
      %v1959 = vsel %vm1950, %v1927, 0.0
      %v1960 = vsel %vm1951, %v1928, 0.0
      %v1961 = vsel %vm1951, %v1929, 0.0
      %v1962 = vsel %vm1952, %v1930, 0.0
      %v1963 = vsel %vm1952, %v1931, 0.0
      %v1964 = vsel %vm1953, %v1932, 0.0
      %v1965 = vsel %vm1953, %v1933, 0.0
      %v1966 = vsel %vm1954, %v1918, 0.0
      %v1967 = vsel %vm1954, %v1919, 0.0
      %v1968 = vsel %vm1955, %v1920, 0.0
      %v1969 = vsel %vm1955, %v1921, 0.0
      %v1970 = vsel %vm1956, %v1922, 0.0
      %v1971 = vsel %vm1956, %v1923, 0.0
      %v1972 = vsel %vm1957, %v1924, 0.0
      %v1973 = vsel %vm1957, %v1925, 0.0
      %v1974 = vmul.f32 %v1934, %v1958
      %v1975 = vmul.f32 %v1935, %v1959
      %v1976 = vmul.f32 %v1936, %v1960
      %v1977 = vmul.f32 %v1937, %v1961
      %v1978 = vmul.f32 %v1938, %v1962
      %v1979 = vmul.f32 %v1939, %v1963
      %v1980 = vmul.f32 %v1940, %v1964
      %v1981 = vmul.f32 %v1941, %v1965
      %v1982 = vmul.f32 %v1942, %v1966
      %v1983 = vmul.f32 %v1943, %v1967
      %v1984 = vmul.f32 %v1944, %v1968
      %v1985 = vmul.f32 %v1945, %v1969
      %v1986 = vmul.f32 %v1946, %v1970
      %v1987 = vmul.f32 %v1947, %v1971
      %v1988 = vmul.f32 %v1948, %v1972
      %v1989 = vmul.f32 %v1949, %v1973
      %v1990 = vadd.f32 %v1974, %v1918
      %v1991 = vadd.f32 %v1975, %v1919
      %v1992 = vadd.f32 %v1976, %v1920
      %v1993 = vadd.f32 %v1977, %v1921
      %v1994 = vadd.f32 %v1978, %v1922
      %v1995 = vadd.f32 %v1979, %v1923
      %v1996 = vadd.f32 %v1980, %v1924
      %v1997 = vadd.f32 %v1981, %v1925
      %v1998 = vadd.f32 %v1982, %v1926
      %v1999 = vadd.f32 %v1983, %v1927
      %v2000 = vadd.f32 %v1984, %v1928
      %v2001 = vadd.f32 %v1985, %v1929
      %v2002 = vadd.f32 %v1986, %v1930
      %v2003 = vadd.f32 %v1987, %v1931
      %v2004 = vadd.f32 %v1988, %v1932
      %v2005 = vadd.f32 %v1989, %v1933
      %v2006 = vmul.f32 %v886, %v1990
      %v2007 = vmul.f32 %v888, %v1991
      %v2008 = vmul.f32 %v890, %v1992
      %v2009 = vmul.f32 %v892, %v1993
      %v2010 = vmul.f32 %v896, %v1994
      %v2011 = vmul.f32 %v898, %v1995
      %v2012 = vmul.f32 %v900, %v1996
      %v2013 = vmul.f32 %v902, %v1997
      %v2014 = vmul.f32 %v906, %v1998
      %v2015 = vmul.f32 %v908, %v1999
      %v2016 = vmul.f32 %v910, %v2000
      %v2017 = vmul.f32 %v912, %v2001
      %v2018 = vmul.f32 %v916, %v2002
      %v2019 = vmul.f32 %v918, %v2003
      %v2020 = vmul.f32 %v920, %v2004
      %v2021 = vmul.f32 %v922, %v2005
      %v2022 = vld [vmem:[%s8] sm:$0xff]
      %v2023 = vld [vmem:[%s8 + $0x8] sm:$0xff]
      %v2024 = vld [vmem:[%s8 + $0x10] sm:$0xff]
      %v2025 = vld [vmem:[%s8 + $0x18] sm:$0xff]
      %v2026 = vld [vmem:[%s8 + $0x20] sm:$0xff]
      %v2027 = vld [vmem:[%s8 + $0x28] sm:$0xff]
      %v2028 = vld [vmem:[%s8 + $0x30] sm:$0xff]
      %v2029 = vld [vmem:[%s8 + $0x38] sm:$0xff]
      %v2030 = vld [vmem:[%s8 + $0x40] sm:$0xff]
      %v2031 = vld [vmem:[%s8 + $0x48] sm:$0xff]
      %v2032 = vld [vmem:[%s8 + $0x50] sm:$0xff]
      %v2033 = vld [vmem:[%s8 + $0x58] sm:$0xff]
      %v2034 = vld [vmem:[%s8 + $0x60] sm:$0xff]
      %v2035 = vld [vmem:[%s8 + $0x68] sm:$0xff]
      %v2036 = vld [vmem:[%s8 + $0x70] sm:$0xff]
      %v2037 = vld [vmem:[%s8 + $0x78] sm:$0xff]
      %v2038 = vld [vmem:[%s8 + $0x80] sm:$0xff]
      %v2039 = vld [vmem:[%s8 + $0x88] sm:$0xff]
      %v2040 = vld [vmem:[%s8 + $0x90] sm:$0xff]
      %v2041 = vld [vmem:[%s8 + $0x98] sm:$0xff]
      %v2042 = vld [vmem:[%s8 + $0xa0] sm:$0xff]
      %v2043 = vld [vmem:[%s8 + $0xa8] sm:$0xff]
      %v2044 = vld [vmem:[%s8 + $0xb0] sm:$0xff]
      %v2045 = vld [vmem:[%s8 + $0xb8] sm:$0xff]
      %v2046 = vld [vmem:[%s8 + $0xc0] sm:$0xff]
      %v2047 = vld [vmem:[%s8 + $0xc8] sm:$0xff]
      %v2048 = vld [vmem:[%s8 + $0xd0] sm:$0xff]
      %v2049 = vld [vmem:[%s8 + $0xd8] sm:$0xff]
      %v2050 = vld [vmem:[%s8 + $0xe0] sm:$0xff]
      %v2051 = vld [vmem:[%s8 + $0xe8] sm:$0xff]
      %v2052 = vld [vmem:[%s8 + $0xf0] sm:$0xff]
      %v2053 = vld [vmem:[%s8 + $0xf8] sm:$0xff]
      %v2054 = vpack.c.bf16 %v2008, %v2006
      %v2055 = vpack.c.bf16 %v2009, %v2007
      %v2056 = vpack.c.bf16 %v2012, %v2010
      %v2057 = vpack.c.bf16 %v2013, %v2011
      %v2058 = vpack.c.bf16 %v2016, %v2014
      %v2059 = vpack.c.bf16 %v2017, %v2015
      %v2060 = vpack.c.bf16 %v2020, %v2018
      %v2061 = vpack.c.bf16 %v2021, %v2019
      %v2062 = vpack.c.bf16 %v2023, %v2022
      %v2063 = vpack.c.bf16 %v2025, %v2024
      %v2064 = vpack.c.bf16 %v2027, %v2026
      %v2065 = vpack.c.bf16 %v2029, %v2028
      %v2066 = vpack.c.bf16 %v2031, %v2030
      %v2067 = vpack.c.bf16 %v2033, %v2032
      %v2068 = vpack.c.bf16 %v2035, %v2034
      %v2069 = vpack.c.bf16 %v2037, %v2036
      %v2070 = vpack.c.bf16 %v2039, %v2038
      %v2071 = vpack.c.bf16 %v2041, %v2040
      %v2072 = vpack.c.bf16 %v2043, %v2042
      %v2073 = vpack.c.bf16 %v2045, %v2044
      %v2074 = vpack.c.bf16 %v2047, %v2046
      %v2075 = vpack.c.bf16 %v2049, %v2048
      %v2076 = vpack.c.bf16 %v2051, %v2050
      %v2077 = vpack.c.bf16 %v2053, %v2052
      %v2078 = vld [vmem:[%s9] sm:$0x1]
      %v2080 = vlaneseq
      %v2081 = vshrl.u32 %v2080, 7
      %v2082 = vsub.s32 0, %v2081
      %v2083 = vrot.slane %v2078, %v2082
      %v2085 = vmul.f32 %v723, %v2083
      %v2086 = vmul.f32 %v724, %v2083
      %v2087 = vmul.f32 %v725, %v2083
      %v2088 = vmul.f32 %v726, %v2083
      %v2089 = vmul.f32 %v727, %v2083
      %v2090 = vmul.f32 %v728, %v2083
      %v2091 = vmul.f32 %v729, %v2083
      %v2092 = vmul.f32 %v730, %v2083
      %2093 = vmatprep.subr.bf16.mxu0 0
      %2094 = vmatpush1.bf16.msra.mxu0 %v2062
      %2095 = vmatprep.subr.bf16.mxu0 0
      %2096 = vmatpush1.bf16.msra.mxu0 %v2063
      %2097 = vmatprep.subr.bf16.mxu0 0
      %2098 = vmatpush1.bf16.msra.mxu0 %v2064
      %2099 = vmatprep.subr.bf16.mxu0 0
      %2100 = vmatpush1.bf16.msra.mxu0 %v2065
      %2101 = vmatprep.subr.bf16.mxu0 0
      %2102 = vmatpush1.bf16.msra.mxu0 %v2066
      %2103 = vmatprep.subr.bf16.mxu0 0
      %2104 = vmatpush1.bf16.msra.mxu0 %v2067
      %2105 = vmatprep.subr.bf16.mxu0 0
      %2106 = vmatpush1.bf16.msra.mxu0 %v2068
      %2107 = vmatprep.subr.bf16.mxu0 0
      %2108 = vmatpush1.bf16.msra.mxu0 %v2069
      %2109 = vmatprep.subr.bf16.mxu0 0
      %2110 = vmatpush1.bf16.msra.mxu0 %v2070
      %2111 = vmatprep.subr.bf16.mxu0 0
      %2112 = vmatpush1.bf16.msra.mxu0 %v2071
      %2113 = vmatprep.subr.bf16.mxu0 0
      %2114 = vmatpush1.bf16.msra.mxu0 %v2072
      %2115 = vmatprep.subr.bf16.mxu0 0
      %2116 = vmatpush1.bf16.msra.mxu0 %v2073
      %2117 = vmatprep.subr.bf16.mxu0 0
      %2118 = vmatpush1.bf16.msra.mxu0 %v2074
      %2119 = vmatprep.subr.bf16.mxu0 0
      %2120 = vmatpush1.bf16.msra.mxu0 %v2075
      %2121 = vmatprep.subr.bf16.mxu0 0
      %2122 = vmatpush1.bf16.msra.mxu0 %v2076
      %2123 = vmatprep.subr.bf16.mxu0 0
      %2124 = vmatpush1.bf16.msra.mxu0 %v2077
      %2125 = vmatprep.mubr.bf16.mxu0 %v2055
      %2126 = vmatmul.mubr.bf16.gmra.mrb[0].mxu0 %v2054
      %v2127 = vpop.f32.mrb[0].mxu0
      %v2128 = vadd.f32 %v2085, %v2127
      %v2129 = vpop.f32.mrb[0].mxu0
      %v2130 = vpop.f32.mrb[0].mxu0
      %v2131 = vadd.f32 %v2086, %v2130
      %v2132 = vpop.f32.mrb[0].mxu0
      %2133 = vmatprep.mubr.bf16.mxu0 %v2057
      %2134 = vmatmul.mubr.bf16.gmra.mrb[0].mxu0 %v2056
      %v2135 = vpop.f32.mrb[0].mxu0
      %v2136 = vadd.f32 %v2087, %v2135
      %v2137 = vpop.f32.mrb[0].mxu0
      %v2138 = vpop.f32.mrb[0].mxu0
      %v2139 = vadd.f32 %v2088, %v2138
      %v2140 = vpop.f32.mrb[0].mxu0
      %2141 = vmatprep.mubr.bf16.mxu0 %v2059
      %2142 = vmatmul.mubr.bf16.gmra.mrb[0].mxu0 %v2058
      %v2143 = vpop.f32.mrb[0].mxu0
      %v2144 = vadd.f32 %v2089, %v2143
      %v2145 = vpop.f32.mrb[0].mxu0
      %v2146 = vpop.f32.mrb[0].mxu0
      %v2147 = vadd.f32 %v2090, %v2146
      %v2148 = vpop.f32.mrb[0].mxu0
      %2149 = vmatprep.mubr.bf16.mxu0 %v2061
      %2150 = vmatmul.mubr.bf16.gmra.mrb[0].mxu0 %v2060
      %v2151 = vpop.f32.mrb[0].mxu0
      %v2152 = vadd.f32 %v2091, %v2151
      %v2153 = vpop.f32.mrb[0].mxu0
      %v2154 = vpop.f32.mrb[0].mxu0
      %v2155 = vadd.f32 %v2092, %v2154
      %v2156 = vpop.f32.mrb[0].mxu0
      %2157 = vdwg.mxu0
      %v2158 = vsub.f32 0.0, %v457
      %v2159 = vsub.f32 0.0, %v460
      %v2160 = vsub.f32 0.0, %v465
      %v2161 = vsub.f32 0.0, %v468
      %v2162 = vsub.f32 0.0, %v473
      %v2163 = vsub.f32 0.0, %v476
      %v2164 = vsub.f32 0.0, %v481
      %v2165 = vsub.f32 0.0, %v484
      %v2166 = vmul.f32 %v2158, 1.442695
      %v2167 = vpow.pop %v2166
      %v2168 = vmul.f32 %v2159, 1.442695
      %v2169 = vpow.pop %v2168
      %v2170 = vmul.f32 %v2160, 1.442695
      %v2171 = vpow.pop %v2170
      %v2172 = vmul.f32 %v2161, 1.442695
      %v2173 = vpow.pop %v2172
      %v2174 = vmul.f32 %v2162, 1.442695
      %v2175 = vpow.pop %v2174
      %v2176 = vmul.f32 %v2163, 1.442695
      %v2177 = vpow.pop %v2176
      %v2178 = vmul.f32 %v2164, 1.442695
      %v2179 = vpow.pop %v2178
      %v2180 = vmul.f32 %v2165, 1.442695
      %v2181 = vpow.pop %v2180
      %v2182 = vadd.f32 %v2167, 1.0
      %v2183 = vadd.f32 %v2169, 1.0
      %v2184 = vadd.f32 %v2171, 1.0
      %v2185 = vadd.f32 %v2173, 1.0
      %v2186 = vadd.f32 %v2175, 1.0
      %v2187 = vadd.f32 %v2177, 1.0
      %v2188 = vadd.f32 %v2179, 1.0
      %v2189 = vadd.f32 %v2181, 1.0
      %v2190 = vrcp.pop %v2182
      %v2191 = vrcp.pop %v2183
      %v2192 = vrcp.pop %v2184
      %v2193 = vrcp.pop %v2185
      %v2194 = vrcp.pop %v2186
      %v2195 = vrcp.pop %v2187
      %v2196 = vrcp.pop %v2188
      %v2197 = vrcp.pop %v2189
      %v2198 = vmul.f32 %v457, %v2190
      %v2199 = vmul.f32 %v460, %v2191
      %v2200 = vmul.f32 %v465, %v2192
      %v2201 = vmul.f32 %v468, %v2193
      %v2202 = vmul.f32 %v473, %v2194
      %v2203 = vmul.f32 %v476, %v2195
      %v2204 = vmul.f32 %v481, %v2196
      %v2205 = vmul.f32 %v484, %v2197
      %2214 = vrot.lane.b32.xlu0 %v2198, 96
      %v2215 = vpop.permute.xlu0 %2214
      %2216 = vrot.lane.b32.xlu0 %v2199, 96
      %v2217 = vpop.permute.xlu0 %2216
      %2218 = vrot.lane.b32.xlu0 %v2200, 96
      %v2219 = vpop.permute.xlu0 %2218
      %2220 = vrot.lane.b32.xlu0 %v2201, 96
      %v2221 = vpop.permute.xlu0 %2220
      %2222 = vrot.lane.b32.xlu0 %v2202, 96
      %v2223 = vpop.permute.xlu0 %2222
      %2224 = vrot.lane.b32.xlu0 %v2203, 96
      %v2225 = vpop.permute.xlu0 %2224
      %2226 = vrot.lane.b32.xlu0 %v2204, 96
      %v2227 = vpop.permute.xlu0 %2226
      %2228 = vrot.lane.b32.xlu0 %v2205, 96
      %v2229 = vpop.permute.xlu0 %2228
      %v2238 = vmul.f32 %v2128, %v2215
      %v2239 = vmul.f32 %v2131, %v2217
      %v2240 = vmul.f32 %v2136, %v2219
      %v2241 = vmul.f32 %v2139, %v2221
      %v2242 = vmul.f32 %v2144, %v2223
      %v2243 = vmul.f32 %v2147, %v2225
      %v2244 = vmul.f32 %v2152, %v2227
      %v2245 = vmul.f32 %v2155, %v2229
      %v2246 = vld [vmem:[%s10] sm:$0xff]
      %v2247 = vld [vmem:[%s10 + $0x8] sm:$0xff]
      %v2248 = vld [vmem:[%s10 + $0x10] sm:$0xff]
      %v2249 = vld [vmem:[%s10 + $0x18] sm:$0xff]
      %v2250 = vpack.c.bf16 %v2239, %v2238
      %v2251 = vpack.c.bf16 %v2241, %v2240
      %v2252 = vpack.c.bf16 %v2243, %v2242
      %v2253 = vpack.c.bf16 %v2245, %v2244
      %v2254 = vpack.c.bf16 %v2247, %v2246
      %v2255 = vpack.c.bf16 %v2249, %v2248
      %v2257 = vsel %vm765, %v2250, 0
      %v2260 = vsel %vm765, %v2251, 0
      %v2263 = vsel %vm765, %v2252, 0
      %v2266 = vsel %vm765, %v2253, 0
      %2268 = vmatprep.subr.bf16.mxu0 0
      %2269 = vmatpush1.bf16.msra.mxu0 %v2254
      %2270 = vmatprep.subr.bf16.mxu0 0
      %2271 = vmatpush1.bf16.msra.mxu0 %v2255
      %2272 = vmatprep.subr.bf16.mxu0 0
      %2273 = vmatpush1.bf16.msra.mxu0 0
      %2274 = vmatprep.subr.bf16.mxu0 0
      %2275 = vmatpush1.bf16.msra.mxu0 0
      %2276 = vmatprep.subr.bf16.mxu0 0
      %2277 = vmatpush1.bf16.msra.mxu0 0
      %2278 = vmatprep.subr.bf16.mxu0 0
      %2279 = vmatpush1.bf16.msra.mxu0 0
      %2280 = vmatprep.subr.bf16.mxu0 0
      %2281 = vmatpush1.bf16.msra.mxu0 0
      %2282 = vmatprep.subr.bf16.mxu0 0
      %2283 = vmatpush1.bf16.msra.mxu0 0
      %2284 = vmatprep.subr.bf16.mxu0 0
      %2285 = vmatpush1.bf16.msra.mxu0 0
      %2286 = vmatprep.subr.bf16.mxu0 0
      %2287 = vmatpush1.bf16.msra.mxu0 0
      %2288 = vmatprep.subr.bf16.mxu0 0
      %2289 = vmatpush1.bf16.msra.mxu0 0
      %2290 = vmatprep.subr.bf16.mxu0 0
      %2291 = vmatpush1.bf16.msra.mxu0 0
      %2292 = vmatprep.subr.bf16.mxu0 0
      %2293 = vmatpush1.bf16.msra.mxu0 0
      %2294 = vmatprep.subr.bf16.mxu0 0
      %2295 = vmatpush1.bf16.msra.mxu0 0
      %2296 = vmatprep.subr.bf16.mxu0 0
      %2297 = vmatpush1.bf16.msra.mxu0 0
      %2298 = vmatprep.subr.bf16.mxu0 0
      %2299 = vmatpush1.bf16.msra.mxu0 0
      %2300 = vmatprep.mubr.bf16.mxu0 0
      %2301 = vmatmul.mubr.bf16.gmra.mrb[0].mxu0 %v2257
      %v2302 = vpop.f32.mrb[0].mxu0
      %v2303 = vadd.f32 0.0, %v2302
      %v2304 = vpop.f32.mrb[0].mxu0
      %v2305 = vpop.f32.mrb[0].mxu0
      %v2306 = vadd.f32 0.0, %v2305
      %v2307 = vpop.f32.mrb[0].mxu0
      %2308 = vmatprep.mubr.bf16.mxu0 0
      %2309 = vmatmul.mubr.bf16.gmra.mrb[0].mxu0 %v2260
      %v2310 = vpop.f32.mrb[0].mxu0
      %v2311 = vadd.f32 0.0, %v2310
      %v2312 = vpop.f32.mrb[0].mxu0
      %v2313 = vpop.f32.mrb[0].mxu0
      %v2314 = vadd.f32 0.0, %v2313
      %v2315 = vpop.f32.mrb[0].mxu0
      %2316 = vmatprep.mubr.bf16.mxu0 0
      %2317 = vmatmul.mubr.bf16.gmra.mrb[0].mxu0 %v2263
      %v2318 = vpop.f32.mrb[0].mxu0
      %v2319 = vadd.f32 0.0, %v2318
      %v2320 = vpop.f32.mrb[0].mxu0
      %v2321 = vpop.f32.mrb[0].mxu0
      %v2322 = vadd.f32 0.0, %v2321
      %v2323 = vpop.f32.mrb[0].mxu0
      %2324 = vmatprep.mubr.bf16.mxu0 0
      %2325 = vmatmul.mubr.bf16.gmra.mrb[0].mxu0 %v2266
      %v2326 = vpop.f32.mrb[0].mxu0
      %v2327 = vadd.f32 0.0, %v2326
      %v2328 = vpop.f32.mrb[0].mxu0
      %v2329 = vpop.f32.mrb[0].mxu0
      %v2330 = vadd.f32 0.0, %v2329
      %v2331 = vpop.f32.mrb[0].mxu0
      %2332 = vdwg.mxu0
      %v2333 = vpack.c.bf16 %v2306, %v2303
      %v2334 = vpack.c.bf16 %v2314, %v2311
      %v2335 = vpack.c.bf16 %v2322, %v2319
      %v2336 = vpack.c.bf16 %v2330, %v2327
      %v2341 = vunpack.c.l.b16 %v2333
      %v2342 = vunpack.c.h.b16 %v2333
      %v2343 = vunpack.c.l.b16 %v2334
      %v2344 = vunpack.c.h.b16 %v2334
      %v2345 = vunpack.c.l.b16 %v2335
      %v2346 = vunpack.c.h.b16 %v2335
      %v2347 = vunpack.c.l.b16 %v2336
      %v2348 = vunpack.c.h.b16 %v2336
      %v2349 = vpack.c.b16 %v2341, %v2341
      %v2350 = vpack.c.b16 %v2342, %v2342
      %v2351 = vpack.c.b16 %v2343, %v2343
      %v2352 = vpack.c.b16 %v2344, %v2344
      %v2353 = vpack.c.b16 %v2345, %v2345
      %v2354 = vpack.c.b16 %v2346, %v2346
      %v2355 = vpack.c.b16 %v2347, %v2347
      %v2356 = vpack.c.b16 %v2348, %v2348
      %2365 = vst [vmem:[%s388] sm:$0xf] %v2349
      %2366 = vst [vmem:[%s388 + $0x4] sm:$0xf] %v2350
      %2367 = vst [vmem:[%s388 + $0x8] sm:$0xf] %v2351
      %2368 = vst [vmem:[%s388 + $0xc] sm:$0xf] %v2352
      %2369 = vst [vmem:[%s388 + $0x10] sm:$0xf] %v2353
      %2370 = vst [vmem:[%s388 + $0x14] sm:$0xf] %v2354
      %2371 = vst [vmem:[%s388 + $0x18] sm:$0xf] %v2355
      %2372 = vst [vmem:[%s388 + $0x1c] sm:$0xf] %v2356
      %s2373 = smul.u32 8, %s22
      %p2374 = scmp.lt.s32.totalorder %s2373, 15
      %s2375 = scalar_select %p2374, %s2373, 15
      %s2376 = smul.addr %s2375, 4
      %s2377 = scalar_lea.vmem %s11, %s2376
      // Predicated region
      $region65: #{self_select_process.1} parent=63 // pred_check
        %p2378 = pneg %p276
      $region66: #{self_select_process.1} parent=63 // pred_check_branch
        %2380 = sbr.rel (%p2378) target = $region68
      $region67: #{self_select_process.1} parent=63 // pred_region
        %s2381 = smul.u32 8, %s22
      $region68: #{self_select_process.1} parent=63 // pred_fallthru
        _
    $region64: #{self_select_process.1} parent=5 // pred_fallthru
      _
    %p2382 = scmp.le.s32.totalorder 2, %s17
    // Predicated region
    $region69: #{self_select_process.1} parent=5 // pred_check
      %p2383 = pneg %p2382
    $region70: #{self_select_process.1} parent=5 // pred_check_branch
      %2385 = sbr.rel (%p2383) target = $region72
    $region71: #{self_select_process.1} parent=5 // pred_region
      %s2386 = ssub.s32 %s17, 2
      // Predicated region
      $region73: #{self_select_process.1} parent=71 // pred_check
        %p2387 = pneg %p282
      $region74: #{self_select_process.1} parent=71 // pred_check_branch
        %2389 = sbr.rel (%p2387) target = $region76
      $region75: #{self_select_process.1} parent=71 // pred_region
        %s2390 = smul.u32 8, %s23
        %p2391 = scmp.lt.s32.totalorder %s2390, 15
        %s2392 = scalar_select %p2391, %s2390, 15
        %s2393 = smul.addr %s2392, 4
        %s2394 = scalar_lea.vmem %s11, %s2393
      $region76: #{self_select_process.1} parent=71 // pred_fallthru
        _
    $region72: #{self_select_process.1} parent=5 // pred_fallthru
      _
  $region6: #{self_select_process.1} parent=0 // loop_footer
    %s21 = sadd.s32 1, %s17
  $region7: #{self_select_process.1} parent=0 // loop_footer_branch
    %16 = sbr.rel target = $region3
  $region8: #{self_select_process.1} parent=0 // loop_exit
    _

</llo_original>
